<compile_context>
chip_gen: v6e
topology: v6e:2x2x1
jax: 0.10.0
libtpu: 0.0.40
codegen_flags: <defaults>
</compile_context>

<pallas_src>
from functools import partial

import jax
import jax.numpy as jnp
from jax.experimental import pallas as pl
from jax.experimental.pallas import tpu as pltpu


# With a realistic (non all-ones) to_qkv init the QK score matmul can also run in
# bf16 for single-pass MXU; kept f32 here because the module spec fills the weight
# with ones, which makes the softmax near-degenerate and sensitive to Q/K rounding.
_QK_DOT_BF16 = False


def _tensorcores_per_chip():
    """2 on dual-TensorCore chips (v7x), else 1 (v5e/v6e). Best-effort probe."""
    try:
        kind = jax.devices()[0].device_kind.lower()
    except Exception:
        return 1
    return 2 if ("v7" in kind or "tpu7" in kind) else 1


def _multi_head_attention(q, k, v, *, bb, heads, dim_head):
    """Batched-over-(head, batch) attention core.

    q: (bb*nq, heads*dim_head) f32, already scaled.
    k: (bb*nk, heads*dim_head) f32.
    v: (bb*nk, heads*dim_head) f32.
    Returns (bb, nq, heads*dim_head) f32.
    """
    hidden = heads * dim_head
    nq = q.shape[0] // bb
    nk = k.shape[0] // bb
    G = heads * bb  # number of independent (head, batch) attention groups

    def to_groups(t, n):
        # (bb*n, h*d) -> (bb*n, h, d) -> (h, bb*n, d) -> (h*bb, n, d); g = h*bb + b.
        t = t.reshape(bb * n, heads, dim_head)
        t = jnp.transpose(t, (1, 0, 2))
        return t.reshape(G, n, dim_head)

    qg = to_groups(q, nq)
    kg = to_groups(k, nk)
    vg = to_groups(v, nk).astype(jnp.bfloat16)

    if _QK_DOT_BF16:
        qg = qg.astype(jnp.bfloat16)
        kg = kg.astype(jnp.bfloat16)

    # One batched score matmul per (head, batch) group; no mask / iota needed.
    sim = jnp.einsum('gqd,gkd->gqk', qg, kg,
                     preferred_element_type=jnp.float32)          # (G, nq, nk)

    # Numerically-stable softmax along the key axis.
    sim = sim - jnp.max(sim, axis=-1, keepdims=True)
    p = jnp.exp(sim)
    p = p * pl.reciprocal(jnp.sum(p, axis=-1, keepdims=True), approx=True)

    # Batched PV matmul: bf16 operands, f32 accumulation.
    out = jnp.einsum('gqk,gkd->gqd', p.astype(jnp.bfloat16), vg,
                     preferred_element_type=jnp.float32)          # (G, nq, d)

    # '... h n d -> ... n (h d)': invert the grouping; final slab is 128 lanes wide.
    out = out.reshape(heads, bb * nq, dim_head)
    out = jnp.transpose(out, (1, 0, 2)).reshape(bb * nq, hidden)
    return out.reshape(bb, nq, hidden)


def _attention_kernel(x_ref, w_ref, o_ref, *, heads, dim_head, scale):
    """Fused QKV projection + multi-head attention for one batch block.

    x_ref: (bb, N, D)              VMEM
    w_ref: (D, 3*heads*dim_head)   VMEM  (transposed to_qkv weight, W^T)
    o_ref: (bb, N, heads*dim_head) VMEM
    """
    bb, N, D = x_ref.shape
    hidden = heads * dim_head

    x = x_ref[...].reshape(bb * N, D).astype(jnp.bfloat16)
    w = w_ref[...].astype(jnp.bfloat16)

    # Single fused QKV projection: bf16 operands, f32 accumulation.
    qkv = jnp.dot(x, w, preferred_element_type=jnp.float32)       # (bb*N, 3*hidden)

    # Lane-aligned 128-wide slices; softmax scale folded in with one VPU multiply.
    q = qkv[:, 0 * hidden:1 * hidden] * jnp.float32(scale)
    k = qkv[:, 1 * hidden:2 * hidden]
    v = qkv[:, 2 * hidden:3 * hidden]

    out = _multi_head_attention(q, k, v, bb=bb, heads=heads, dim_head=dim_head)
    o_ref[...] = out.astype(o_ref.dtype)


def _attention_kernel_qsplit(xq_ref, x_ref, w_ref, o_ref, *, heads, dim_head, scale):
    """Query-split variant (dual-TensorCore chips with B == 1): each grid step projects
    Q only for its query rows but K/V for the whole sequence, so both cores get work."""
    bb, nq, D = xq_ref.shape            # bb == 1 on this path
    N = x_ref.shape[1]
    hidden = heads * dim_head

    w = w_ref[...].astype(jnp.bfloat16)
    xq = xq_ref[...].reshape(bb * nq, D).astype(jnp.bfloat16)
    xkv = x_ref[...].reshape(bb * N, D).astype(jnp.bfloat16)

    q = jnp.dot(xq, w[:, :hidden],
                preferred_element_type=jnp.float32) * jnp.float32(scale)
    kv = jnp.dot(xkv, w[:, hidden:], preferred_element_type=jnp.float32)
    k = kv[:, :hidden]
    v = kv[:, hidden:]

    out = _multi_head_attention(q, k, v, bb=bb, heads=heads, dim_head=dim_head)
    o_ref[...] = out.astype(o_ref.dtype)


def attention_forward(x, w_qkv_t, *, heads, dim_head):
    """x: (B, N, D) float32; w_qkv_t: (D, 3*heads*dim_head) float32 (to_qkv.weight^T)."""
    B, N, D = x.shape
    hidden = heads * dim_head
    scale = float(dim_head) ** -0.5
    n_tc = _tensorcores_per_chip()

    G = B * heads
    cost = pl.CostEstimate(
        flops=2 * B * N * D * (3 * hidden) + 2 * (2 * G * N * N * dim_head),
        transcendentals=G * N * N + G * N,       # exps + approximate reciprocals
        bytes_accessed=4 * (x.size + w_qkv_t.size + B * N * hidden),
    )
    out_shape = jax.ShapeDtypeStruct((B, N, hidden), jnp.float32)
    # TODO(synk): if scaled up (large N / bb), set vmem_limit_bytes explicitly against
    # v7x's 64 MiB physical VMEM and re-derive block sizes; defaults are ample here.
    compiler_params = pltpu.CompilerParams(dimension_semantics=("parallel",))

    if n_tc > 1 and B == 1 and N % 16 == 0:
        # Dual-TC chip, single batch element: split query rows across 2 parallel steps.
        nq = N // 2
        kernel = partial(_attention_kernel_qsplit,
                         heads=heads, dim_head=dim_head, scale=scale)
        return pl.pallas_call(
            kernel,
            out_shape=out_shape,
            grid=(2,),
            in_specs=[
                pl.BlockSpec((1, nq, D), lambda i: (0, i, 0)),
                pl.BlockSpec((1, N, D), lambda i: (0, 0, 0)),
                pl.BlockSpec((D, 3 * hidden), lambda i: (0, 0)),
            ],
            out_specs=pl.BlockSpec((1, nq, hidden), lambda i: (0, i, 0)),
            compiler_params=compiler_params,
            cost_estimate=cost,
        )(x, x, w_qkv_t)

    # Single-TC chips (v5e/v6e): the grid is a sequential loop, so collapse the whole
    # batch into one grid step (bb = B).  Dual-TC (v7x): split the batch across two
    # parallel grid steps so both cores get work.
    if n_tc > 1 and B > 1:
        bb = B // n_tc if B % n_tc == 0 else 1
    else:
        bb = B
    kernel = partial(_attention_kernel, heads=heads, dim_head=dim_head, scale=scale)
    return pl.pallas_call(
        kernel,
        out_shape=out_shape,
        grid=(B // bb,),
        in_specs=[
            pl.BlockSpec((bb, N, D), lambda b: (b, 0, 0)),
            pl.BlockSpec((D, 3 * hidden), lambda b: (0, 0)),
        ],
        out_specs=pl.BlockSpec((bb, N, hidden), lambda b: (b, 0, 0)),
        compiler_params=compiler_params,
        cost_estimate=cost,
    )(x, w_qkv_t)


def attention_reference(x, w_qkv_t, *, heads, dim_head):
    """Pure-JAX f32 reference replicating the PyTorch forward (default args)."""
    hidden = heads * dim_head
    scale = dim_head ** (-0.5)
    qkv = x @ w_qkv_t                                            # (B, N, 3*hidden)
    q, k, v = jnp.split(qkv, 3, axis=-1)

    def split_heads(t):  # '... n (h d) -> ... h n d'
        B, N, _ = t.shape
        return jnp.transpose(t.reshape(B, N, heads, dim_head), (0, 2, 1, 3))

    q, k, v = split_heads(q), split_heads(k), split_heads(v)
    q = q * scale
    sim = jnp.einsum('bhid,bhjd->bhij', q, k)
    sim = sim - jnp.max(sim, axis=-1, keepdims=True)
    attn = jax.nn.softmax(sim, axis=-1)
    out = jnp.einsum('bhij,bhjd->bhid', attn, v)
    B, _, N, _ = out.shape
    return jnp.transpose(out, (0, 2, 1, 3)).reshape(B, N, hidden)  # '... h n d -> ... n (h d)'


if __name__ == "__main__":
    # Module config: dim=32, heads=4, dim_head=32 -> hidden_dim=128
    dim = 32
    heads = 4
    dim_head = 32
    hidden = heads * dim_head

    B, N = 2, 8

    key = jax.random.PRNGKey(0)
    x = jax.random.normal(key, (B, N, dim), dtype=jnp.float32)

    # Deterministic parameter init mirroring the module's __init__:
    #   self.to_qkv.weight.data.fill_(1)  -> Linear weight (3*hidden, dim), all ones.
    # Stored transposed (dim, 3*hidden) so that y = x @ W^T == x @ w_qkv_t.
    w_qkv_t = jnp.ones((dim, 3 * hidden), dtype=jnp.float32)
    # to_out is initialized by the module (all ones) but NOT applied on this forward
    # path (only in the focus_present_mask branch) — kept only for parity.
    w_out_t = jnp.ones((hidden, dim), dtype=jnp.float32)  # unused on this path

    out = attention_forward(x, w_qkv_t, heads=heads, dim_head=dim_head)
    out = jax.block_until_ready(out)

    ref = attention_reference(x, w_qkv_t, heads=heads, dim_head=dim_head)

    assert out.shape == (B, N, hidden), out.shape
    # Tolerance accounts for bf16 projection / P / V operands + approximate reciprocal.
    assert jnp.allclose(out, ref, atol=5e-2, rtol=5e-2), float(jnp.max(jnp.abs(out - ref)))

    print("KERNEL_OK")
</pallas_src>

<mosaic_0001>
module attributes {stable_mosaic.version = 11 : i64} {
  func.func @_attention_kernel(%arg0: i32, %arg1: memref<2x8x32xf32, #tpu.memory_space<vmem>>, %arg2: memref<32x384xf32, #tpu.memory_space<vmem>>, %arg3: memref<2x8x128xf32, #tpu.memory_space<vmem>>) attributes {dimension_semantics = [#tpu.dimension_semantics<parallel>], iteration_bounds = array<i64: 1>, scalar_prefetch = 0 : i64, scratch_operands = 0 : i64, tpu.core_type = #tpu.core_type<tc>, window_params = [{transform_indices = @transform_0, window_bounds = array<i64: 2, 8, 32>}, {pipeline_mode = #tpu.pipeline_mode<synchronous>, transform_indices = @transform_1, window_bounds = array<i64: 32, 384>}, {transform_indices = @transform_2, window_bounds = array<i64: 2, 8, 128>}]} {
    %c0 = arith.constant 0 : index
    %c0_0 = arith.constant 0 : index
    %c0_1 = arith.constant 0 : index
    %0 = vector.load %arg1[%c0, %c0_0, %c0_1] : memref<2x8x32xf32, #tpu.memory_space<vmem>>, vector<2x8x32xf32>
    %1 = vector.shape_cast %0 : vector<2x8x32xf32> to vector<16x32xf32>
    %2 = arith.truncf %1 : vector<16x32xf32> to vector<16x32xbf16>
    %c0_2 = arith.constant 0 : index
    %c0_3 = arith.constant 0 : index
    %3 = vector.load %arg2[%c0_2, %c0_3] : memref<32x384xf32, #tpu.memory_space<vmem>>, vector<32x384xf32>
    %4 = arith.truncf %3 : vector<32x384xf32> to vector<32x384xbf16>
    %cst = arith.constant dense<0.000000e+00> : vector<16x384xf32>
    %5 = tpu.matmul %2, %4, %cst {dimension_numbers = #tpu.dot_dimension_numbers<[1], [0], [0], [1], [0, 0, 1, 1], [], []>} : vector<16x32xbf16>, vector<32x384xbf16>, vector<16x384xf32> -> vector<16x384xf32>
    %6 = vector.extract_strided_slice %5 {offsets = [0, 0], sizes = [16, 128], strides = [1, 1]} : vector<16x384xf32> to vector<16x128xf32>
    %cst_4 = arith.constant 0.176776692 : f32
    %7 = vector.broadcast %cst_4 : f32 to vector<16x128xf32>
    %8 = arith.mulf %6, %7 : vector<16x128xf32>
    %9 = vector.extract_strided_slice %5 {offsets = [0, 128], sizes = [16, 128], strides = [1, 1]} : vector<16x384xf32> to vector<16x128xf32>
    %10 = vector.extract_strided_slice %5 {offsets = [0, 256], sizes = [16, 128], strides = [1, 1]} : vector<16x384xf32> to vector<16x128xf32>
    %11 = vector.shape_cast %8 : vector<16x128xf32> to vector<16x4x32xf32>
    %12 = tpu.transpose %11, [1, 0, 2] : vector<16x4x32xf32> -> vector<4x16x32xf32>
    %13 = vector.shape_cast %12 : vector<4x16x32xf32> to vector<8x8x32xf32>
    %14 = vector.shape_cast %9 : vector<16x128xf32> to vector<16x4x32xf32>
    %15 = tpu.transpose %14, [1, 0, 2] : vector<16x4x32xf32> -> vector<4x16x32xf32>
    %16 = vector.shape_cast %15 : vector<4x16x32xf32> to vector<8x8x32xf32>
    %17 = vector.shape_cast %10 : vector<16x128xf32> to vector<16x4x32xf32>
    %18 = tpu.transpose %17, [1, 0, 2] : vector<16x4x32xf32> -> vector<4x16x32xf32>
    %19 = vector.shape_cast %18 : vector<4x16x32xf32> to vector<8x8x32xf32>
    %20 = arith.truncf %19 : vector<8x8x32xf32> to vector<8x8x32xbf16>
    "tpu.trace_start"() <{level = 10 : i32, message = "gqd,gkd->gqk"}> : () -> ()
    %cst_5 = arith.constant dense<0.000000e+00> : vector<8x8x8xf32>
    %21 = tpu.matmul %13, %16, %cst_5 {dimension_numbers = #tpu.dot_dimension_numbers<[2], [2], [1], [1], [0, 0, 0, 1, 1, 1], [0], [0]>} : vector<8x8x32xf32>, vector<8x8x32xf32>, vector<8x8x8xf32> -> vector<8x8x8xf32>
    "tpu.trace_stop"() : () -> ()
    %cst_6 = arith.constant dense<0xFF800000> : vector<8x8xf32>
    %22 = vector.multi_reduction <maximumf>, %21, %cst_6 [2] : vector<8x8x8xf32> to vector<8x8xf32>
    %23 = vector.shape_cast %22 : vector<8x8xf32> to vector<8x8x1xf32>
    %24 = vector.broadcast %23 : vector<8x8x1xf32> to vector<8x8x8xf32>
    %25 = arith.subf %21, %24 : vector<8x8x8xf32>
    %26 = math.exp %25 : vector<8x8x8xf32>
    %cst_7 = arith.constant dense<0.000000e+00> : vector<8x8xf32>
    %27 = vector.multi_reduction <add>, %26, %cst_7 [2] : vector<8x8x8xf32> to vector<8x8xf32>
    %28 = vector.shape_cast %27 : vector<8x8xf32> to vector<8x8x1xf32>
    %29 = tpu.reciprocal %28 {approx = true} : vector<8x8x1xf32> -> vector<8x8x1xf32>
    %30 = vector.broadcast %29 : vector<8x8x1xf32> to vector<8x8x8xf32>
    %31 = arith.mulf %26, %30 : vector<8x8x8xf32>
    %32 = arith.truncf %31 : vector<8x8x8xf32> to vector<8x8x8xbf16>
    "tpu.trace_start"() <{level = 10 : i32, message = "gqk,gkd->gqd"}> : () -> ()
    %cst_8 = arith.constant dense<0.000000e+00> : vector<8x8x32xf32>
    %33 = tpu.matmul %32, %20, %cst_8 {dimension_numbers = #tpu.dot_dimension_numbers<[2], [1], [1], [2], [0, 0, 0, 1, 1, 2], [0], [0]>} : vector<8x8x8xbf16>, vector<8x8x32xbf16>, vector<8x8x32xf32> -> vector<8x8x32xf32>
    "tpu.trace_stop"() : () -> ()
    %34 = vector.shape_cast %33 : vector<8x8x32xf32> to vector<4x16x32xf32>
    %35 = tpu.transpose %34, [1, 0, 2] : vector<4x16x32xf32> -> vector<16x4x32xf32>
    %36 = vector.shape_cast %35 : vector<16x4x32xf32> to vector<16x128xf32>
    %37 = vector.shape_cast %36 : vector<16x128xf32> to vector<2x8x128xf32>
    %c0_9 = arith.constant 0 : index
    %c0_10 = arith.constant 0 : index
    %c0_11 = arith.constant 0 : index
    %38 = vector.load %arg3[%c0_9, %c0_10, %c0_11] : memref<2x8x128xf32, #tpu.memory_space<vmem>>, vector<2x8x128xf32>
    tpu.vector_store %arg3[%c0_9, %c0_10, %c0_11], %37 {strides = array<i32>} : memref<2x8x128xf32, #tpu.memory_space<vmem>>, vector<2x8x128xf32>,
    return
  }
  func.func @transform_0(%arg0: i32) -> (i32, i32, i32) {
    %c0_i32 = arith.constant 0 : i32
    %c0_i32_0 = arith.constant 0 : i32
    %c0_i32_1 = arith.constant 0 : i32
    return %arg0, %c0_i32, %c0_i32_0 : i32, i32, i32
  }
  func.func @transform_1(%arg0: i32) -> (i32, i32) {
    %c0_i32 = arith.constant 0 : i32
    %c0_i32_0 = arith.constant 0 : i32
    %c0_i32_1 = arith.constant 0 : i32
    return %c0_i32, %c0_i32_0 : i32, i32
  }
  func.func @transform_2(%arg0: i32) -> (i32, i32, i32) {
    %c0_i32 = arith.constant 0 : i32
    %c0_i32_0 = arith.constant 0 : i32
    %c0_i32_1 = arith.constant 0 : i32
    return %arg0, %c0_i32, %c0_i32_0 : i32, i32, i32
  }
}

</mosaic_0001>

<llo_original>
// kernel: tpu_custom_call.1
$region0: #{tpu_custom_call.1}
  #allocation0 [shape = 'u32[]', space=smem, size = 0x4, offset = 0x4, fixed_abs, tag = 'smem constant byte address 0x4 - core index']
  #allocation1 [shape = 'u32[144,128]{1,0:T(1,128)}', space=vmem, size = 0x12000, scoped, tag = 'internal scratch']
  %s0 = inlined_call_operand.hbm [shape: f32[2,8,32], index: 0, kind: input, shape index: {}]
  %s1 = inlined_call_operand.hbm [shape: f32[32,384], index: 1, kind: input, shape index: {}]
  %s2 = inlined_call_operand.hbm [shape: f32[2,8,128], index: 2, kind: output, shape index: {}]
  %s3 = sld [smem:[#allocation0]]
  $region26: #{tpu_custom_call.1} parent=0
    _
  %s5 = ssub.s32 1, %s3
  %s6 = scalar_select 0, %s5, %s3
  $region1: #{tpu_custom_call.1} parent=0
    #allocation2 [shape = 'u8[8192]{0}', space=vmem, size = 0x2000, scoped, tag = 'input window, operand 0, single buffered']
    #allocation3 [shape = 's32[1]{0}', space=sflag, size = 0x4, scoped, tag = 'scoped memory for tpu_custom_call.1']
    #allocation4 [shape = 's32[1]{0}', space=sflag, size = 0x4, scoped, tag = 'scoped memory for tpu_custom_call.1']
    #allocation5 [shape = 'u8[49152]{0}', space=vmem, size = 0xc000, scoped, tag = 'input window, operand 1, single buffered']
    #allocation6 [shape = 's32[1]{0}', space=sflag, size = 0x4, scoped, tag = 'scoped memory for tpu_custom_call.1']
    #allocation7 [shape = 'u8[8192]{0}', space=vmem, size = 0x2000, scoped, tag = 'output window, operand 0, single buffered']
    %7 = vsyncpa [#allocation3], 0
    %8 = vsyncpa [#allocation6], 0
    %9 = vsyncpa [#allocation4], 0
    // Predicated region
    $region2: #{tpu_custom_call.1} parent=1 // pred_check
      _
    $region3: #{tpu_custom_call.1} parent=1 // pred_check_branch
      %11 = sbr.rel (0) target = $region5
    $region4: #{tpu_custom_call.1} parent=1 // pred_region
      %s13 = ssub.s32 256, 256
      %14 = vsyncadd [#allocation3], %s13
      %s15 = sshll.u32 [#allocation2], 4
      %s16 = int_to_ptr.vmem [resolvable:$true] %s15
      %21 = dma.hbm_to_vmem [thread:$0]  %s0, 256, %s16, [#allocation3], 128, 128, 8
    $region5: #{tpu_custom_call.1} parent=1 // pred_fallthru
      _
    // Predicated region
    $region6: #{tpu_custom_call.1} parent=1 // pred_check
      _
    $region7: #{tpu_custom_call.1} parent=1 // pred_check_branch
      %23 = sbr.rel (0) target = $region9
    $region8: #{tpu_custom_call.1} parent=1 // pred_region
      %s25 = ssub.s32 1536, 1536
      %26 = vsyncadd [#allocation6], %s25
      %s27 = sshll.u32 [#allocation5], 4
      %s28 = int_to_ptr.vmem [resolvable:$true] %s27
      %33 = dma.hbm_to_vmem [thread:$0]  %s1, 1536, %s28, [#allocation6], 384, 384, 24
    $region9: #{tpu_custom_call.1} parent=1 // pred_fallthru
      _
    // Predicated region
    $region10: #{tpu_custom_call.1} parent=1 // pred_check
      _
    $region11: #{tpu_custom_call.1} parent=1 // pred_check_branch
      %35 = sbr.rel (0) target = $region13
    $region12: #{tpu_custom_call.1} parent=1 // pred_region
      %36 = dma.done [#allocation3], 256
    $region13: #{tpu_custom_call.1} parent=1 // pred_fallthru
      _
    // Predicated region
    $region14: #{tpu_custom_call.1} parent=1 // pred_check
      _
    $region15: #{tpu_custom_call.1} parent=1 // pred_check_branch
      %38 = sbr.rel (0) target = $region17
    $region16: #{tpu_custom_call.1} parent=1 // pred_region
      %39 = dma.done [#allocation6], 1536
    $region17: #{tpu_custom_call.1} parent=1 // pred_fallthru
      _
    %v41 = vld [vmem:[#allocation2] sm:$0xff]
    %v42 = vld [vmem:[#allocation2 + $0x8] sm:$0xff]
    %v43 = vpack.c.bf16 %v42, %v41
    %v44 = vld [vmem:[#allocation5] sm:$0xff]
    %v45 = vld [vmem:[#allocation5 + $0x8] sm:$0xff]
    %v46 = vld [vmem:[#allocation5 + $0x10] sm:$0xff]
    %v47 = vld [vmem:[#allocation5 + $0x18] sm:$0xff]
    %v48 = vld [vmem:[#allocation5 + $0x20] sm:$0xff]
    %v49 = vld [vmem:[#allocation5 + $0x28] sm:$0xff]
    %v50 = vld [vmem:[#allocation5 + $0x30] sm:$0xff]
    %v51 = vld [vmem:[#allocation5 + $0x38] sm:$0xff]
    %v52 = vld [vmem:[#allocation5 + $0x40] sm:$0xff]
    %v53 = vld [vmem:[#allocation5 + $0x48] sm:$0xff]
    %v54 = vld [vmem:[#allocation5 + $0x50] sm:$0xff]
    %v55 = vld [vmem:[#allocation5 + $0x58] sm:$0xff]
    %v56 = vpack.c.bf16 %v47, %v44
    %v57 = vpack.c.bf16 %v48, %v45
    %v58 = vpack.c.bf16 %v49, %v46
    %v59 = vpack.c.bf16 %v53, %v50
    %v60 = vpack.c.bf16 %v54, %v51
    %v61 = vpack.c.bf16 %v55, %v52
    %vm62 = vcmask 261120
    %v64 = vsel %vm62, %v43, 0
    %66 = vmatprep.subr.bf16.mxu0 0
    %67 = vmatpush1.bf16.msra.mxu0 0
    %68 = vmatprep.subr.bf16.mxu0 0
    %69 = vmatpush1.bf16.msra.mxu0 0
    %70 = vmatprep.subr.bf16.mxu0 0
    %71 = vmatpush1.bf16.msra.mxu0 0
    %72 = vmatprep.subr.bf16.mxu0 0
    %73 = vmatpush1.bf16.msra.mxu0 0
    %74 = vmatprep.subr.bf16.mxu0 0
    %75 = vmatpush1.bf16.msra.mxu0 0
    %76 = vmatprep.subr.bf16.mxu0 0
    %77 = vmatpush1.bf16.msra.mxu0 0
    %78 = vmatprep.subr.bf16.mxu0 %v60
    %79 = vmatpush1.bf16.msra.mxu0 %v59
    %80 = vmatprep.subr.bf16.mxu0 %v57
    %81 = vmatpush1.bf16.msra.mxu0 %v56
    %82 = vmatprep.subr.bf16.mxu0 0
    %83 = vmatpush2.bf16.msra.mxu0 0
    %84 = vmatprep.subr.bf16.mxu0 0
    %85 = vmatpush2.bf16.msra.mxu0 0
    %86 = vmatprep.subr.bf16.mxu0 0
    %87 = vmatpush2.bf16.msra.mxu0 0
    %88 = vmatprep.subr.bf16.mxu0 0
    %89 = vmatpush2.bf16.msra.mxu0 0
    %90 = vmatprep.subr.bf16.mxu0 0
    %91 = vmatpush2.bf16.msra.mxu0 0
    %92 = vmatprep.subr.bf16.mxu0 0
    %93 = vmatpush2.bf16.msra.mxu0 0
    %94 = vmatprep.subr.bf16.mxu0 0
    %95 = vmatpush2.bf16.msra.mxu0 0
    %96 = vmatprep.subr.bf16.mxu0 0
    %97 = vmatpush2.bf16.msra.mxu0 0
    %98 = vmatprep.mubr.bf16.mxu0 0
    %99 = vmatmul.mubr.bf16.gmra.mxu0 %v64
    %v100 = vpop.f32.mrf.mxu0
    %v101 = vadd.f32 0.0, %v100
    %v102 = vpop.f32.mrf.mxu0
    %v103 = vadd.f32 0.0, %v102
    %v104 = vpop.f32.mrf.mxu0
    %v105 = vadd.f32 0.0, %v104
    %v106 = vpop.f32.mrf.mxu0
    %v107 = vadd.f32 0.0, %v106
    %108 = vdwg.mxu0
    %109 = vmatprep.subr.bf16.mxu0 0
    %110 = vmatpush1.bf16.msra.mxu0 0
    %111 = vmatprep.subr.bf16.mxu0 0
    %112 = vmatpush1.bf16.msra.mxu0 0
    %113 = vmatprep.subr.bf16.mxu0 0
    %114 = vmatpush1.bf16.msra.mxu0 0
    %115 = vmatprep.subr.bf16.mxu0 0
    %116 = vmatpush1.bf16.msra.mxu0 0
    %117 = vmatprep.subr.bf16.mxu0 0
    %118 = vmatpush1.bf16.msra.mxu0 0
    %119 = vmatprep.subr.bf16.mxu0 0
    %120 = vmatpush1.bf16.msra.mxu0 0
    %121 = vmatprep.subr.bf16.mxu0 0
    %122 = vmatpush1.bf16.msra.mxu0 %v61
    %123 = vmatprep.subr.bf16.mxu0 0
    %124 = vmatpush1.bf16.msra.mxu0 %v58
    %125 = vmatprep.subr.bf16.mxu0 0
    %126 = vmatpush2.bf16.msra.mxu0 0
    %127 = vmatprep.subr.bf16.mxu0 0
    %128 = vmatpush2.bf16.msra.mxu0 0
    %129 = vmatprep.subr.bf16.mxu0 0
    %130 = vmatpush2.bf16.msra.mxu0 0
    %131 = vmatprep.subr.bf16.mxu0 0
    %132 = vmatpush2.bf16.msra.mxu0 0
    %133 = vmatprep.subr.bf16.mxu0 0
    %134 = vmatpush2.bf16.msra.mxu0 0
    %135 = vmatprep.subr.bf16.mxu0 0
    %136 = vmatpush2.bf16.msra.mxu0 0
    %137 = vmatprep.subr.bf16.mxu0 0
    %138 = vmatpush2.bf16.msra.mxu0 0
    %139 = vmatprep.subr.bf16.mxu0 0
    %140 = vmatpush2.bf16.msra.mxu0 0
    %141 = vmatprep.mubr.bf16.mxu0 0
    %142 = vmatmul.mubr.bf16.gmra.mxu0 %v64
    %v143 = vpop.f32.mrf.mxu0
    %v144 = vadd.f32 0.0, %v143
    %v145 = vpop.f32.mrf.mxu0
    %v146 = vpop.f32.mrf.mxu0
    %v147 = vadd.f32 0.0, %v146
    %v148 = vpop.f32.mrf.mxu0
    %149 = vdwg.mxu0
    %v150 = vmul.f32 %v101, 0.17677669
    %v151 = vmul.f32 %v105, 0.17677669
    %154 = vrot.lane.b32.xlu0 %v150, 96
    %v155 = vpop.permute.xlu0 %154
    %156 = vrot.lane.b32.xlu0 %v151, 96
    %v157 = vpop.permute.xlu0 %156
    %160 = vrot.lane.b32.xlu0 %v150, 64
    %v161 = vpop.permute.xlu0 %160
    %162 = vrot.lane.b32.xlu0 %v151, 64
    %v163 = vpop.permute.xlu0 %162
    %166 = vrot.lane.b32.xlu0 %v150, 32
    %v167 = vpop.permute.xlu0 %166
    %168 = vrot.lane.b32.xlu0 %v151, 32
    %v169 = vpop.permute.xlu0 %168
    %v172 = vcombine.low %v150, %v161
    %v173 = vcombine.high %v150, %v161
    %v175 = vunpack.c.l.s4 1983009808
    %v176 = vunpack.c.0.s8 %v175
    %v177 = vlaneseq
    %v178 = vshrl.u32 %v177, 7
    %v179 = vsub.s32 %v176, %v178
    %v180 = vrot.slane %v172, %v179
    %v182 = vunpack.c.l.s4 1983009808
    %v183 = vunpack.c.0.s8 %v182
    %v184 = vlaneseq
    %v185 = vshrl.u32 %v184, 7
    %v186 = vsub.s32 %v183, %v185
    %v187 = vrot.slane %v173, %v186
    %v188 = vcombine.low %v155, %v167
    %v189 = vcombine.high %v155, %v167
    %v191 = vunpack.c.l.s4 1983009808
    %v192 = vunpack.c.0.s8 %v191
    %v193 = vlaneseq
    %v194 = vshrl.u32 %v193, 7
    %v195 = vsub.s32 %v192, %v194
    %v196 = vrot.slane %v188, %v195
    %v198 = vunpack.c.l.s4 1983009808
    %v199 = vunpack.c.0.s8 %v198
    %v200 = vlaneseq
    %v201 = vshrl.u32 %v200, 7
    %v202 = vsub.s32 %v199, %v201
    %v203 = vrot.slane %v189, %v202
    %v204 = vcombine.low %v180, %v196
    %v205 = vcombine.high %v180, %v196
    %v207 = vunpack.c.l.s4 1934713408
    %v208 = vunpack.c.0.s8 %v207
    %v209 = vlaneseq
    %v210 = vshrl.u32 %v209, 7
    %v211 = vsub.s32 %v208, %v210
    %v212 = vrot.slane %v204, %v211
    %v214 = vunpack.c.l.s4 1934713408
    %v215 = vunpack.c.0.s8 %v214
    %v216 = vlaneseq
    %v217 = vshrl.u32 %v216, 7
    %v218 = vsub.s32 %v215, %v217
    %v219 = vrot.slane %v205, %v218
    %v220 = vcombine.low %v187, %v203
    %v221 = vcombine.high %v187, %v203
    %v223 = vunpack.c.l.s4 1934713408
    %v224 = vunpack.c.0.s8 %v223
    %v225 = vlaneseq
    %v226 = vshrl.u32 %v225, 7
    %v227 = vsub.s32 %v224, %v226
    %v228 = vrot.slane %v220, %v227
    %v230 = vunpack.c.l.s4 1934713408
    %v231 = vunpack.c.0.s8 %v230
    %v232 = vlaneseq
    %v233 = vshrl.u32 %v232, 7
    %v234 = vsub.s32 %v231, %v233
    %v235 = vrot.slane %v221, %v234
    %v236 = vcombine.high %v212, 0.0
    %v237 = vcombine.high %v219, 0.0
    %v238 = vcombine.high %v228, 0.0
    %v239 = vcombine.high %v235, 0.0
    %v240 = vcombine.low %v151, %v163
    %v241 = vcombine.high %v151, %v163
    %v243 = vunpack.c.l.s4 1983009808
    %v244 = vunpack.c.0.s8 %v243
    %v245 = vlaneseq
    %v246 = vshrl.u32 %v245, 7
    %v247 = vsub.s32 %v244, %v246
    %v248 = vrot.slane %v240, %v247
    %v250 = vunpack.c.l.s4 1983009808
    %v251 = vunpack.c.0.s8 %v250
    %v252 = vlaneseq
    %v253 = vshrl.u32 %v252, 7
    %v254 = vsub.s32 %v251, %v253
    %v255 = vrot.slane %v241, %v254
    %v256 = vcombine.low %v157, %v169
    %v257 = vcombine.high %v157, %v169
    %v259 = vunpack.c.l.s4 1983009808
    %v260 = vunpack.c.0.s8 %v259
    %v261 = vlaneseq
    %v262 = vshrl.u32 %v261, 7
    %v263 = vsub.s32 %v260, %v262
    %v264 = vrot.slane %v256, %v263
    %v266 = vunpack.c.l.s4 1983009808
    %v267 = vunpack.c.0.s8 %v266
    %v268 = vlaneseq
    %v269 = vshrl.u32 %v268, 7
    %v270 = vsub.s32 %v267, %v269
    %v271 = vrot.slane %v257, %v270
    %v272 = vcombine.low %v248, %v264
    %v273 = vcombine.high %v248, %v264
    %v275 = vunpack.c.l.s4 1934713408
    %v276 = vunpack.c.0.s8 %v275
    %v277 = vlaneseq
    %v278 = vshrl.u32 %v277, 7
    %v279 = vsub.s32 %v276, %v278
    %v280 = vrot.slane %v272, %v279
    %v282 = vunpack.c.l.s4 1934713408
    %v283 = vunpack.c.0.s8 %v282
    %v284 = vlaneseq
    %v285 = vshrl.u32 %v284, 7
    %v286 = vsub.s32 %v283, %v285
    %v287 = vrot.slane %v273, %v286
    %v288 = vcombine.low %v255, %v271
    %v289 = vcombine.high %v255, %v271
    %v291 = vunpack.c.l.s4 1934713408
    %v292 = vunpack.c.0.s8 %v291
    %v293 = vlaneseq
    %v294 = vshrl.u32 %v293, 7
    %v295 = vsub.s32 %v292, %v294
    %v296 = vrot.slane %v288, %v295
    %v298 = vunpack.c.l.s4 1934713408
    %v299 = vunpack.c.0.s8 %v298
    %v300 = vlaneseq
    %v301 = vshrl.u32 %v300, 7
    %v302 = vsub.s32 %v299, %v301
    %v303 = vrot.slane %v289, %v302
    %v304 = vcombine.high %v280, 0.0
    %v305 = vcombine.high %v287, 0.0
    %v306 = vcombine.high %v296, 0.0
    %v307 = vcombine.high %v303, 0.0
    %v308 = vcombine.low %v212, %v219
    %v310 = vunpack.c.l.s4 1983009808
    %v311 = vunpack.c.0.s8 %v310
    %v312 = vlaneseq
    %v313 = vshrl.u32 %v312, 7
    %v314 = vsub.s32 %v311, %v313
    %v315 = vrot.slane %v308, %v314
    %v316 = vcombine.low %v236, %v237
    %v318 = vunpack.c.l.s4 1983009808
    %v319 = vunpack.c.0.s8 %v318
    %v320 = vlaneseq
    %v321 = vshrl.u32 %v320, 7
    %v322 = vsub.s32 %v319, %v321
    %v323 = vrot.slane %v316, %v322
    %v324 = vcombine.low %v228, %v235
    %v326 = vunpack.c.l.s4 1983009808
    %v327 = vunpack.c.0.s8 %v326
    %v328 = vlaneseq
    %v329 = vshrl.u32 %v328, 7
    %v330 = vsub.s32 %v327, %v329
    %v331 = vrot.slane %v324, %v330
    %v332 = vcombine.low %v238, %v239
    %v334 = vunpack.c.l.s4 1983009808
    %v335 = vunpack.c.0.s8 %v334
    %v336 = vlaneseq
    %v337 = vshrl.u32 %v336, 7
    %v338 = vsub.s32 %v335, %v337
    %v339 = vrot.slane %v332, %v338
    %v340 = vcombine.low %v315, %v323
    %v341 = vcombine.high %v315, %v323
    %v343 = vunpack.c.l.s4 1934713408
    %v344 = vunpack.c.0.s8 %v343
    %v345 = vlaneseq
    %v346 = vshrl.u32 %v345, 7
    %v347 = vsub.s32 %v344, %v346
    %v348 = vrot.slane %v340, %v347
    %v350 = vunpack.c.l.s4 1934713408
    %v351 = vunpack.c.0.s8 %v350
    %v352 = vlaneseq
    %v353 = vshrl.u32 %v352, 7
    %v354 = vsub.s32 %v351, %v353
    %v355 = vrot.slane %v341, %v354
    %v356 = vcombine.low %v331, %v339
    %v357 = vcombine.high %v331, %v339
    %v359 = vunpack.c.l.s4 1934713408
    %v360 = vunpack.c.0.s8 %v359
    %v361 = vlaneseq
    %v362 = vshrl.u32 %v361, 7
    %v363 = vsub.s32 %v360, %v362
    %v364 = vrot.slane %v356, %v363
    %v366 = vunpack.c.l.s4 1934713408
    %v367 = vunpack.c.0.s8 %v366
    %v368 = vlaneseq
    %v369 = vshrl.u32 %v368, 7
    %v370 = vsub.s32 %v367, %v369
    %v371 = vrot.slane %v357, %v370
    %v372 = vcombine.low %v348, %v364
    %v373 = vcombine.high %v348, %v364
    %v374 = vcombine.low %v355, %v371
    %v375 = vcombine.high %v355, %v371
    %v376 = vcombine.low %v280, %v287
    %v378 = vunpack.c.l.s4 1983009808
    %v379 = vunpack.c.0.s8 %v378
    %v380 = vlaneseq
    %v381 = vshrl.u32 %v380, 7
    %v382 = vsub.s32 %v379, %v381
    %v383 = vrot.slane %v376, %v382
    %v384 = vcombine.low %v304, %v305
    %v386 = vunpack.c.l.s4 1983009808
    %v387 = vunpack.c.0.s8 %v386
    %v388 = vlaneseq
    %v389 = vshrl.u32 %v388, 7
    %v390 = vsub.s32 %v387, %v389
    %v391 = vrot.slane %v384, %v390
    %v392 = vcombine.low %v296, %v303
    %v394 = vunpack.c.l.s4 1983009808
    %v395 = vunpack.c.0.s8 %v394
    %v396 = vlaneseq
    %v397 = vshrl.u32 %v396, 7
    %v398 = vsub.s32 %v395, %v397
    %v399 = vrot.slane %v392, %v398
    %v400 = vcombine.low %v306, %v307
    %v402 = vunpack.c.l.s4 1983009808
    %v403 = vunpack.c.0.s8 %v402
    %v404 = vlaneseq
    %v405 = vshrl.u32 %v404, 7
    %v406 = vsub.s32 %v403, %v405
    %v407 = vrot.slane %v400, %v406
    %v408 = vcombine.low %v383, %v391
    %v409 = vcombine.high %v383, %v391
    %v411 = vunpack.c.l.s4 1934713408
    %v412 = vunpack.c.0.s8 %v411
    %v413 = vlaneseq
    %v414 = vshrl.u32 %v413, 7
    %v415 = vsub.s32 %v412, %v414
    %v416 = vrot.slane %v408, %v415
    %v418 = vunpack.c.l.s4 1934713408
    %v419 = vunpack.c.0.s8 %v418
    %v420 = vlaneseq
    %v421 = vshrl.u32 %v420, 7
    %v422 = vsub.s32 %v419, %v421
    %v423 = vrot.slane %v409, %v422
    %v424 = vcombine.low %v399, %v407
    %v425 = vcombine.high %v399, %v407
    %v427 = vunpack.c.l.s4 1934713408
    %v428 = vunpack.c.0.s8 %v427
    %v429 = vlaneseq
    %v430 = vshrl.u32 %v429, 7
    %v431 = vsub.s32 %v428, %v430
    %v432 = vrot.slane %v424, %v431
    %v434 = vunpack.c.l.s4 1934713408
    %v435 = vunpack.c.0.s8 %v434
    %v436 = vlaneseq
    %v437 = vshrl.u32 %v436, 7
    %v438 = vsub.s32 %v435, %v437
    %v439 = vrot.slane %v425, %v438
    %v440 = vcombine.low %v416, %v432
    %v441 = vcombine.high %v416, %v432
    %v442 = vcombine.low %v423, %v439
    %v443 = vcombine.high %v423, %v439
    %446 = vrot.lane.b32.xlu0 %v103, 96
    %v447 = vpop.permute.xlu0 %446
    %448 = vrot.lane.b32.xlu0 %v107, 96
    %v449 = vpop.permute.xlu0 %448
    %452 = vrot.lane.b32.xlu0 %v103, 64
    %v453 = vpop.permute.xlu0 %452
    %454 = vrot.lane.b32.xlu0 %v107, 64
    %v455 = vpop.permute.xlu0 %454
    %458 = vrot.lane.b32.xlu0 %v103, 32
    %v459 = vpop.permute.xlu0 %458
    %460 = vrot.lane.b32.xlu0 %v107, 32
    %v461 = vpop.permute.xlu0 %460
    %v464 = vcombine.low %v103, %v453
    %v465 = vcombine.high %v103, %v453
    %v467 = vunpack.c.l.s4 1983009808
    %v468 = vunpack.c.0.s8 %v467
    %v469 = vlaneseq
    %v470 = vshrl.u32 %v469, 7
    %v471 = vsub.s32 %v468, %v470
    %v472 = vrot.slane %v464, %v471
    %v474 = vunpack.c.l.s4 1983009808
    %v475 = vunpack.c.0.s8 %v474
    %v476 = vlaneseq
    %v477 = vshrl.u32 %v476, 7
    %v478 = vsub.s32 %v475, %v477
    %v479 = vrot.slane %v465, %v478
    %v480 = vcombine.low %v447, %v459
    %v481 = vcombine.high %v447, %v459
    %v483 = vunpack.c.l.s4 1983009808
    %v484 = vunpack.c.0.s8 %v483
    %v485 = vlaneseq
    %v486 = vshrl.u32 %v485, 7
    %v487 = vsub.s32 %v484, %v486
    %v488 = vrot.slane %v480, %v487
    %v490 = vunpack.c.l.s4 1983009808
    %v491 = vunpack.c.0.s8 %v490
    %v492 = vlaneseq
    %v493 = vshrl.u32 %v492, 7
    %v494 = vsub.s32 %v491, %v493
    %v495 = vrot.slane %v481, %v494
    %v496 = vcombine.low %v472, %v488
    %v497 = vcombine.high %v472, %v488
    %v499 = vunpack.c.l.s4 1934713408
    %v500 = vunpack.c.0.s8 %v499
    %v501 = vlaneseq
    %v502 = vshrl.u32 %v501, 7
    %v503 = vsub.s32 %v500, %v502
    %v504 = vrot.slane %v496, %v503
    %v506 = vunpack.c.l.s4 1934713408
    %v507 = vunpack.c.0.s8 %v506
    %v508 = vlaneseq
    %v509 = vshrl.u32 %v508, 7
    %v510 = vsub.s32 %v507, %v509
    %v511 = vrot.slane %v497, %v510
    %v512 = vcombine.low %v479, %v495
    %v513 = vcombine.high %v479, %v495
    %v515 = vunpack.c.l.s4 1934713408
    %v516 = vunpack.c.0.s8 %v515
    %v517 = vlaneseq
    %v518 = vshrl.u32 %v517, 7
    %v519 = vsub.s32 %v516, %v518
    %v520 = vrot.slane %v512, %v519
    %v522 = vunpack.c.l.s4 1934713408
    %v523 = vunpack.c.0.s8 %v522
    %v524 = vlaneseq
    %v525 = vshrl.u32 %v524, 7
    %v526 = vsub.s32 %v523, %v525
    %v527 = vrot.slane %v513, %v526
    %v528 = vcombine.high %v504, 0.0
    %v529 = vcombine.high %v511, 0.0
    %v530 = vcombine.high %v520, 0.0
    %v531 = vcombine.high %v527, 0.0
    %v532 = vcombine.low %v107, %v455
    %v533 = vcombine.high %v107, %v455
    %v535 = vunpack.c.l.s4 1983009808
    %v536 = vunpack.c.0.s8 %v535
    %v537 = vlaneseq
    %v538 = vshrl.u32 %v537, 7
    %v539 = vsub.s32 %v536, %v538
    %v540 = vrot.slane %v532, %v539
    %v542 = vunpack.c.l.s4 1983009808
    %v543 = vunpack.c.0.s8 %v542
    %v544 = vlaneseq
    %v545 = vshrl.u32 %v544, 7
    %v546 = vsub.s32 %v543, %v545
    %v547 = vrot.slane %v533, %v546
    %v548 = vcombine.low %v449, %v461
    %v549 = vcombine.high %v449, %v461
    %v551 = vunpack.c.l.s4 1983009808
    %v552 = vunpack.c.0.s8 %v551
    %v553 = vlaneseq
    %v554 = vshrl.u32 %v553, 7
    %v555 = vsub.s32 %v552, %v554
    %v556 = vrot.slane %v548, %v555
    %v558 = vunpack.c.l.s4 1983009808
    %v559 = vunpack.c.0.s8 %v558
    %v560 = vlaneseq
    %v561 = vshrl.u32 %v560, 7
    %v562 = vsub.s32 %v559, %v561
    %v563 = vrot.slane %v549, %v562
    %v564 = vcombine.low %v540, %v556
    %v565 = vcombine.high %v540, %v556
    %v567 = vunpack.c.l.s4 1934713408
    %v568 = vunpack.c.0.s8 %v567
    %v569 = vlaneseq
    %v570 = vshrl.u32 %v569, 7
    %v571 = vsub.s32 %v568, %v570
    %v572 = vrot.slane %v564, %v571
    %v574 = vunpack.c.l.s4 1934713408
    %v575 = vunpack.c.0.s8 %v574
    %v576 = vlaneseq
    %v577 = vshrl.u32 %v576, 7
    %v578 = vsub.s32 %v575, %v577
    %v579 = vrot.slane %v565, %v578
    %v580 = vcombine.low %v547, %v563
    %v581 = vcombine.high %v547, %v563
    %v583 = vunpack.c.l.s4 1934713408
    %v584 = vunpack.c.0.s8 %v583
    %v585 = vlaneseq
    %v586 = vshrl.u32 %v585, 7
    %v587 = vsub.s32 %v584, %v586
    %v588 = vrot.slane %v580, %v587
    %v590 = vunpack.c.l.s4 1934713408
    %v591 = vunpack.c.0.s8 %v590
    %v592 = vlaneseq
    %v593 = vshrl.u32 %v592, 7
    %v594 = vsub.s32 %v591, %v593
    %v595 = vrot.slane %v581, %v594
    %v596 = vcombine.high %v572, 0.0
    %v597 = vcombine.high %v579, 0.0
    %v598 = vcombine.high %v588, 0.0
    %v599 = vcombine.high %v595, 0.0
    %v600 = vcombine.low %v504, %v511
    %v602 = vunpack.c.l.s4 1983009808
    %v603 = vunpack.c.0.s8 %v602
    %v604 = vlaneseq
    %v605 = vshrl.u32 %v604, 7
    %v606 = vsub.s32 %v603, %v605
    %v607 = vrot.slane %v600, %v606
    %v608 = vcombine.low %v528, %v529
    %v610 = vunpack.c.l.s4 1983009808
    %v611 = vunpack.c.0.s8 %v610
    %v612 = vlaneseq
    %v613 = vshrl.u32 %v612, 7
    %v614 = vsub.s32 %v611, %v613
    %v615 = vrot.slane %v608, %v614
    %v616 = vcombine.low %v520, %v527
    %v618 = vunpack.c.l.s4 1983009808
    %v619 = vunpack.c.0.s8 %v618
    %v620 = vlaneseq
    %v621 = vshrl.u32 %v620, 7
    %v622 = vsub.s32 %v619, %v621
    %v623 = vrot.slane %v616, %v622
    %v624 = vcombine.low %v530, %v531
    %v626 = vunpack.c.l.s4 1983009808
    %v627 = vunpack.c.0.s8 %v626
    %v628 = vlaneseq
    %v629 = vshrl.u32 %v628, 7
    %v630 = vsub.s32 %v627, %v629
    %v631 = vrot.slane %v624, %v630
    %v632 = vcombine.low %v607, %v615
    %v633 = vcombine.high %v607, %v615
    %v635 = vunpack.c.l.s4 1934713408
    %v636 = vunpack.c.0.s8 %v635
    %v637 = vlaneseq
    %v638 = vshrl.u32 %v637, 7
    %v639 = vsub.s32 %v636, %v638
    %v640 = vrot.slane %v632, %v639
    %v642 = vunpack.c.l.s4 1934713408
    %v643 = vunpack.c.0.s8 %v642
    %v644 = vlaneseq
    %v645 = vshrl.u32 %v644, 7
    %v646 = vsub.s32 %v643, %v645
    %v647 = vrot.slane %v633, %v646
    %v648 = vcombine.low %v623, %v631
    %v649 = vcombine.high %v623, %v631
    %v651 = vunpack.c.l.s4 1934713408
    %v652 = vunpack.c.0.s8 %v651
    %v653 = vlaneseq
    %v654 = vshrl.u32 %v653, 7
    %v655 = vsub.s32 %v652, %v654
    %v656 = vrot.slane %v648, %v655
    %v658 = vunpack.c.l.s4 1934713408
    %v659 = vunpack.c.0.s8 %v658
    %v660 = vlaneseq
    %v661 = vshrl.u32 %v660, 7
    %v662 = vsub.s32 %v659, %v661
    %v663 = vrot.slane %v649, %v662
    %v664 = vcombine.low %v640, %v656
    %v665 = vcombine.high %v640, %v656
    %v666 = vcombine.low %v647, %v663
    %v667 = vcombine.high %v647, %v663
    %v668 = vcombine.low %v572, %v579
    %v670 = vunpack.c.l.s4 1983009808
    %v671 = vunpack.c.0.s8 %v670
    %v672 = vlaneseq
    %v673 = vshrl.u32 %v672, 7
    %v674 = vsub.s32 %v671, %v673
    %v675 = vrot.slane %v668, %v674
    %v676 = vcombine.low %v596, %v597
    %v678 = vunpack.c.l.s4 1983009808
    %v679 = vunpack.c.0.s8 %v678
    %v680 = vlaneseq
    %v681 = vshrl.u32 %v680, 7
    %v682 = vsub.s32 %v679, %v681
    %v683 = vrot.slane %v676, %v682
    %v684 = vcombine.low %v588, %v595
    %v686 = vunpack.c.l.s4 1983009808
    %v687 = vunpack.c.0.s8 %v686
    %v688 = vlaneseq
    %v689 = vshrl.u32 %v688, 7
    %v690 = vsub.s32 %v687, %v689
    %v691 = vrot.slane %v684, %v690
    %v692 = vcombine.low %v598, %v599
    %v694 = vunpack.c.l.s4 1983009808
    %v695 = vunpack.c.0.s8 %v694
    %v696 = vlaneseq
    %v697 = vshrl.u32 %v696, 7
    %v698 = vsub.s32 %v695, %v697
    %v699 = vrot.slane %v692, %v698
    %v700 = vcombine.low %v675, %v683
    %v701 = vcombine.high %v675, %v683
    %v703 = vunpack.c.l.s4 1934713408
    %v704 = vunpack.c.0.s8 %v703
    %v705 = vlaneseq
    %v706 = vshrl.u32 %v705, 7
    %v707 = vsub.s32 %v704, %v706
    %v708 = vrot.slane %v700, %v707
    %v710 = vunpack.c.l.s4 1934713408
    %v711 = vunpack.c.0.s8 %v710
    %v712 = vlaneseq
    %v713 = vshrl.u32 %v712, 7
    %v714 = vsub.s32 %v711, %v713
    %v715 = vrot.slane %v701, %v714
    %v716 = vcombine.low %v691, %v699
    %v717 = vcombine.high %v691, %v699
    %v719 = vunpack.c.l.s4 1934713408
    %v720 = vunpack.c.0.s8 %v719
    %v721 = vlaneseq
    %v722 = vshrl.u32 %v721, 7
    %v723 = vsub.s32 %v720, %v722
    %v724 = vrot.slane %v716, %v723
    %v726 = vunpack.c.l.s4 1934713408
    %v727 = vunpack.c.0.s8 %v726
    %v728 = vlaneseq
    %v729 = vshrl.u32 %v728, 7
    %v730 = vsub.s32 %v727, %v729
    %v731 = vrot.slane %v717, %v730
    %v732 = vcombine.low %v708, %v724
    %v733 = vcombine.high %v708, %v724
    %v734 = vcombine.low %v715, %v731
    %v735 = vcombine.high %v715, %v731
    %738 = vrot.lane.b32.xlu0 %v144, 96
    %v739 = vpop.permute.xlu0 %738
    %740 = vrot.lane.b32.xlu0 %v147, 96
    %v741 = vpop.permute.xlu0 %740
    %744 = vrot.lane.b32.xlu0 %v144, 64
    %v745 = vpop.permute.xlu0 %744
    %746 = vrot.lane.b32.xlu0 %v147, 64
    %v747 = vpop.permute.xlu0 %746
    %750 = vrot.lane.b32.xlu0 %v144, 32
    %v751 = vpop.permute.xlu0 %750
    %752 = vrot.lane.b32.xlu0 %v147, 32
    %v753 = vpop.permute.xlu0 %752
    %v756 = vcombine.low %v144, %v745
    %v757 = vcombine.high %v144, %v745
    %v759 = vunpack.c.l.s4 1983009808
    %v760 = vunpack.c.0.s8 %v759
    %v761 = vlaneseq
    %v762 = vshrl.u32 %v761, 7
    %v763 = vsub.s32 %v760, %v762
    %v764 = vrot.slane %v756, %v763
    %v766 = vunpack.c.l.s4 1983009808
    %v767 = vunpack.c.0.s8 %v766
    %v768 = vlaneseq
    %v769 = vshrl.u32 %v768, 7
    %v770 = vsub.s32 %v767, %v769
    %v771 = vrot.slane %v757, %v770
    %v772 = vcombine.low %v739, %v751
    %v773 = vcombine.high %v739, %v751
    %v775 = vunpack.c.l.s4 1983009808
    %v776 = vunpack.c.0.s8 %v775
    %v777 = vlaneseq
    %v778 = vshrl.u32 %v777, 7
    %v779 = vsub.s32 %v776, %v778
    %v780 = vrot.slane %v772, %v779
    %v782 = vunpack.c.l.s4 1983009808
    %v783 = vunpack.c.0.s8 %v782
    %v784 = vlaneseq
    %v785 = vshrl.u32 %v784, 7
    %v786 = vsub.s32 %v783, %v785
    %v787 = vrot.slane %v773, %v786
    %v788 = vcombine.low %v764, %v780
    %v789 = vcombine.high %v764, %v780
    %v791 = vunpack.c.l.s4 1934713408
    %v792 = vunpack.c.0.s8 %v791
    %v793 = vlaneseq
    %v794 = vshrl.u32 %v793, 7
    %v795 = vsub.s32 %v792, %v794
    %v796 = vrot.slane %v788, %v795
    %v798 = vunpack.c.l.s4 1934713408
    %v799 = vunpack.c.0.s8 %v798
    %v800 = vlaneseq
    %v801 = vshrl.u32 %v800, 7
    %v802 = vsub.s32 %v799, %v801
    %v803 = vrot.slane %v789, %v802
    %v804 = vcombine.low %v771, %v787
    %v805 = vcombine.high %v771, %v787
    %v807 = vunpack.c.l.s4 1934713408
    %v808 = vunpack.c.0.s8 %v807
    %v809 = vlaneseq
    %v810 = vshrl.u32 %v809, 7
    %v811 = vsub.s32 %v808, %v810
    %v812 = vrot.slane %v804, %v811
    %v814 = vunpack.c.l.s4 1934713408
    %v815 = vunpack.c.0.s8 %v814
    %v816 = vlaneseq
    %v817 = vshrl.u32 %v816, 7
    %v818 = vsub.s32 %v815, %v817
    %v819 = vrot.slane %v805, %v818
    %v820 = vcombine.high %v796, 0.0
    %v821 = vcombine.high %v803, 0.0
    %v822 = vcombine.high %v812, 0.0
    %v823 = vcombine.high %v819, 0.0
    %v824 = vcombine.low %v147, %v747
    %v825 = vcombine.high %v147, %v747
    %v827 = vunpack.c.l.s4 1983009808
    %v828 = vunpack.c.0.s8 %v827
    %v829 = vlaneseq
    %v830 = vshrl.u32 %v829, 7
    %v831 = vsub.s32 %v828, %v830
    %v832 = vrot.slane %v824, %v831
    %v834 = vunpack.c.l.s4 1983009808
    %v835 = vunpack.c.0.s8 %v834
    %v836 = vlaneseq
    %v837 = vshrl.u32 %v836, 7
    %v838 = vsub.s32 %v835, %v837
    %v839 = vrot.slane %v825, %v838
    %v840 = vcombine.low %v741, %v753
    %v841 = vcombine.high %v741, %v753
    %v843 = vunpack.c.l.s4 1983009808
    %v844 = vunpack.c.0.s8 %v843
    %v845 = vlaneseq
    %v846 = vshrl.u32 %v845, 7
    %v847 = vsub.s32 %v844, %v846
    %v848 = vrot.slane %v840, %v847
    %v850 = vunpack.c.l.s4 1983009808
    %v851 = vunpack.c.0.s8 %v850
    %v852 = vlaneseq
    %v853 = vshrl.u32 %v852, 7
    %v854 = vsub.s32 %v851, %v853
    %v855 = vrot.slane %v841, %v854
    %v856 = vcombine.low %v832, %v848
    %v857 = vcombine.high %v832, %v848
    %v859 = vunpack.c.l.s4 1934713408
    %v860 = vunpack.c.0.s8 %v859
    %v861 = vlaneseq
    %v862 = vshrl.u32 %v861, 7
    %v863 = vsub.s32 %v860, %v862
    %v864 = vrot.slane %v856, %v863
    %v866 = vunpack.c.l.s4 1934713408
    %v867 = vunpack.c.0.s8 %v866
    %v868 = vlaneseq
    %v869 = vshrl.u32 %v868, 7
    %v870 = vsub.s32 %v867, %v869
    %v871 = vrot.slane %v857, %v870
    %v872 = vcombine.low %v839, %v855
    %v873 = vcombine.high %v839, %v855
    %v875 = vunpack.c.l.s4 1934713408
    %v876 = vunpack.c.0.s8 %v875
    %v877 = vlaneseq
    %v878 = vshrl.u32 %v877, 7
    %v879 = vsub.s32 %v876, %v878
    %v880 = vrot.slane %v872, %v879
    %v882 = vunpack.c.l.s4 1934713408
    %v883 = vunpack.c.0.s8 %v882
    %v884 = vlaneseq
    %v885 = vshrl.u32 %v884, 7
    %v886 = vsub.s32 %v883, %v885
    %v887 = vrot.slane %v873, %v886
    %v888 = vcombine.high %v864, 0.0
    %v889 = vcombine.high %v871, 0.0
    %v890 = vcombine.high %v880, 0.0
    %v891 = vcombine.high %v887, 0.0
    %v892 = vcombine.low %v796, %v803
    %v894 = vunpack.c.l.s4 1983009808
    %v895 = vunpack.c.0.s8 %v894
    %v896 = vlaneseq
    %v897 = vshrl.u32 %v896, 7
    %v898 = vsub.s32 %v895, %v897
    %v899 = vrot.slane %v892, %v898
    %v900 = vcombine.low %v820, %v821
    %v902 = vunpack.c.l.s4 1983009808
    %v903 = vunpack.c.0.s8 %v902
    %v904 = vlaneseq
    %v905 = vshrl.u32 %v904, 7
    %v906 = vsub.s32 %v903, %v905
    %v907 = vrot.slane %v900, %v906
    %v908 = vcombine.low %v812, %v819
    %v910 = vunpack.c.l.s4 1983009808
    %v911 = vunpack.c.0.s8 %v910
    %v912 = vlaneseq
    %v913 = vshrl.u32 %v912, 7
    %v914 = vsub.s32 %v911, %v913
    %v915 = vrot.slane %v908, %v914
    %v916 = vcombine.low %v822, %v823
    %v918 = vunpack.c.l.s4 1983009808
    %v919 = vunpack.c.0.s8 %v918
    %v920 = vlaneseq
    %v921 = vshrl.u32 %v920, 7
    %v922 = vsub.s32 %v919, %v921
    %v923 = vrot.slane %v916, %v922
    %v924 = vcombine.low %v899, %v907
    %v925 = vcombine.high %v899, %v907
    %v927 = vunpack.c.l.s4 1934713408
    %v928 = vunpack.c.0.s8 %v927
    %v929 = vlaneseq
    %v930 = vshrl.u32 %v929, 7
    %v931 = vsub.s32 %v928, %v930
    %v932 = vrot.slane %v924, %v931
    %v934 = vunpack.c.l.s4 1934713408
    %v935 = vunpack.c.0.s8 %v934
    %v936 = vlaneseq
    %v937 = vshrl.u32 %v936, 7
    %v938 = vsub.s32 %v935, %v937
    %v939 = vrot.slane %v925, %v938
    %v940 = vcombine.low %v915, %v923
    %v941 = vcombine.high %v915, %v923
    %v943 = vunpack.c.l.s4 1934713408
    %v944 = vunpack.c.0.s8 %v943
    %v945 = vlaneseq
    %v946 = vshrl.u32 %v945, 7
    %v947 = vsub.s32 %v944, %v946
    %v948 = vrot.slane %v940, %v947
    %v950 = vunpack.c.l.s4 1934713408
    %v951 = vunpack.c.0.s8 %v950
    %v952 = vlaneseq
    %v953 = vshrl.u32 %v952, 7
    %v954 = vsub.s32 %v951, %v953
    %v955 = vrot.slane %v941, %v954
    %v956 = vcombine.low %v932, %v948
    %v957 = vcombine.high %v932, %v948
    %v958 = vcombine.low %v939, %v955
    %v959 = vcombine.high %v939, %v955
    %v960 = vcombine.low %v864, %v871
    %v962 = vunpack.c.l.s4 1983009808
    %v963 = vunpack.c.0.s8 %v962
    %v964 = vlaneseq
    %v965 = vshrl.u32 %v964, 7
    %v966 = vsub.s32 %v963, %v965
    %v967 = vrot.slane %v960, %v966
    %v968 = vcombine.low %v888, %v889
    %v970 = vunpack.c.l.s4 1983009808
    %v971 = vunpack.c.0.s8 %v970
    %v972 = vlaneseq
    %v973 = vshrl.u32 %v972, 7
    %v974 = vsub.s32 %v971, %v973
    %v975 = vrot.slane %v968, %v974
    %v976 = vcombine.low %v880, %v887
    %v978 = vunpack.c.l.s4 1983009808
    %v979 = vunpack.c.0.s8 %v978
    %v980 = vlaneseq
    %v981 = vshrl.u32 %v980, 7
    %v982 = vsub.s32 %v979, %v981
    %v983 = vrot.slane %v976, %v982
    %v984 = vcombine.low %v890, %v891
    %v986 = vunpack.c.l.s4 1983009808
    %v987 = vunpack.c.0.s8 %v986
    %v988 = vlaneseq
    %v989 = vshrl.u32 %v988, 7
    %v990 = vsub.s32 %v987, %v989
    %v991 = vrot.slane %v984, %v990
    %v992 = vcombine.low %v967, %v975
    %v993 = vcombine.high %v967, %v975
    %v995 = vunpack.c.l.s4 1934713408
    %v996 = vunpack.c.0.s8 %v995
    %v997 = vlaneseq
    %v998 = vshrl.u32 %v997, 7
    %v999 = vsub.s32 %v996, %v998
    %v1000 = vrot.slane %v992, %v999
    %v1002 = vunpack.c.l.s4 1934713408
    %v1003 = vunpack.c.0.s8 %v1002
    %v1004 = vlaneseq
    %v1005 = vshrl.u32 %v1004, 7
    %v1006 = vsub.s32 %v1003, %v1005
    %v1007 = vrot.slane %v993, %v1006
    %v1008 = vcombine.low %v983, %v991
    %v1009 = vcombine.high %v983, %v991
    %v1011 = vunpack.c.l.s4 1934713408
    %v1012 = vunpack.c.0.s8 %v1011
    %v1013 = vlaneseq
    %v1014 = vshrl.u32 %v1013, 7
    %v1015 = vsub.s32 %v1012, %v1014
    %v1016 = vrot.slane %v1008, %v1015
    %v1018 = vunpack.c.l.s4 1934713408
    %v1019 = vunpack.c.0.s8 %v1018
    %v1020 = vlaneseq
    %v1021 = vshrl.u32 %v1020, 7
    %v1022 = vsub.s32 %v1019, %v1021
    %v1023 = vrot.slane %v1009, %v1022
    %v1024 = vcombine.low %v1000, %v1016
    %v1025 = vcombine.high %v1000, %v1016
    %v1026 = vcombine.low %v1007, %v1023
    %v1027 = vcombine.high %v1007, %v1023
    %v1028 = vpack.c.bf16 %v956, %v956
    %v1029 = vpack.c.bf16 %v1024, %v1024
    %v1030 = vpack.c.bf16 %v957, %v957
    %v1031 = vpack.c.bf16 %v1025, %v1025
    %v1032 = vpack.c.bf16 %v958, %v958
    %v1033 = vpack.c.bf16 %v1026, %v1026
    %v1034 = vpack.c.bf16 %v959, %v959
    %v1035 = vpack.c.bf16 %v1027, %v1027
    %v1037 = vsel %vm62, %v372, 0
    %v1040 = vsel %vm62, %v664, 0
    %1042 = vmatprep.subr.mxu0 0.0
    %1043 = vmatpush1.xpose.msra.mxu0 0.0
    %1044 = vmatprep.subr.mxu0 0.0
    %1045 = vmatpush1.xpose.msra.mxu0 0.0
    %1046 = vmatprep.subr.mxu0 0.0
    %1047 = vmatpush1.xpose.msra.mxu0 0.0
    %1048 = vmatprep.subr.mxu0 0.0
    %1049 = vmatpush1.xpose.msra.mxu0 0.0
    %1050 = vmatprep.subr.mxu0 0.0
    %1051 = vmatpush1.xpose.msra.mxu0 0.0
    %1052 = vmatprep.subr.mxu0 0.0
    %1053 = vmatpush1.xpose.msra.mxu0 0.0
    %1054 = vmatprep.subr.mxu0 0.0
    %1055 = vmatpush1.xpose.msra.mxu0 0.0
    %1056 = vmatprep.subr.mxu0 0.0
    %1057 = vmatpush1.xpose.msra.mxu0 0.0
    %1058 = vmatprep.subr.mxu0 0.0
    %1059 = vmatpush1.xpose.msra.mxu0 0.0
    %1060 = vmatprep.subr.mxu0 0.0
    %1061 = vmatpush1.xpose.msra.mxu0 0.0
    %1062 = vmatprep.subr.mxu0 0.0
    %1063 = vmatpush1.xpose.msra.mxu0 0.0
    %1064 = vmatprep.subr.mxu0 0.0
    %1065 = vmatpush1.xpose.msra.mxu0 0.0
    %1066 = vmatprep.subr.mxu0 0.0
    %1067 = vmatpush1.xpose.msra.mxu0 0.0
    %1068 = vmatprep.subr.mxu0 0.0
    %1069 = vmatpush1.xpose.msra.mxu0 0.0
    %1070 = vmatprep.subr.mxu0 0.0
    %1071 = vmatpush1.xpose.msra.mxu0 0.0
    %1072 = vmatprep.subr.mxu0 0.0
    %1073 = vmatpush1.xpose.msra.mxu0 %v1040
    %1074 = vmatprep.subr.mxu0 0.0
    %1075 = vmatpush2.xpose.msra.mxu0 0.0
    %1076 = vmatprep.subr.mxu0 0.0
    %1077 = vmatpush2.xpose.msra.mxu0 0.0
    %1078 = vmatprep.subr.mxu0 0.0
    %1079 = vmatpush2.xpose.msra.mxu0 0.0
    %1080 = vmatprep.subr.mxu0 0.0
    %1081 = vmatpush2.xpose.msra.mxu0 0.0
    %1082 = vmatprep.subr.mxu0 0.0
    %1083 = vmatpush2.xpose.msra.mxu0 0.0
    %1084 = vmatprep.subr.mxu0 0.0
    %1085 = vmatpush2.xpose.msra.mxu0 0.0
    %1086 = vmatprep.subr.mxu0 0.0
    %1087 = vmatpush2.xpose.msra.mxu0 0.0
    %1088 = vmatprep.subr.mxu0 0.0
    %1089 = vmatpush2.xpose.msra.mxu0 0.0
    %1090 = vmatprep.subr.mxu0 0.0
    %1091 = vmatpush2.xpose.msra.mxu0 0.0
    %1092 = vmatprep.subr.mxu0 0.0
    %1093 = vmatpush2.xpose.msra.mxu0 0.0
    %1094 = vmatprep.subr.mxu0 0.0
    %1095 = vmatpush2.xpose.msra.mxu0 0.0
    %1096 = vmatprep.subr.mxu0 0.0
    %1097 = vmatpush2.xpose.msra.mxu0 0.0
    %1098 = vmatprep.subr.mxu0 0.0
    %1099 = vmatpush2.xpose.msra.mxu0 0.0
    %1100 = vmatprep.subr.mxu0 0.0
    %1101 = vmatpush2.xpose.msra.mxu0 0.0
    %1102 = vmatprep.subr.mxu0 0.0
    %1103 = vmatpush2.xpose.msra.mxu0 0.0
    %1104 = vmatprep.subr.mxu0 0.0
    %1105 = vmatpush2.xpose.msra.mxu0 0.0
    %1106 = vmatprep.mubr.f32.mxu0 0.0
    %1107 = vmatmul.mubr.f32.gmra.mxu0 %v1037
    %v1108 = vpop.f32.mrf.mxu0
    %v1109 = vadd.f32 0.0, %v1108
    %v1110 = vpop.f32.mrf.mxu0
    %1111 = vdwg.mxu0
    %v1113 = vsel %vm62, %v440, 0
    %v1116 = vsel %vm62, %v732, 0
    %1118 = vmatprep.subr.mxu0 0.0
    %1119 = vmatpush1.xpose.msra.mxu0 0.0
    %1120 = vmatprep.subr.mxu0 0.0
    %1121 = vmatpush1.xpose.msra.mxu0 0.0
    %1122 = vmatprep.subr.mxu0 0.0
    %1123 = vmatpush1.xpose.msra.mxu0 0.0
    %1124 = vmatprep.subr.mxu0 0.0
    %1125 = vmatpush1.xpose.msra.mxu0 0.0
    %1126 = vmatprep.subr.mxu0 0.0
    %1127 = vmatpush1.xpose.msra.mxu0 0.0
    %1128 = vmatprep.subr.mxu0 0.0
    %1129 = vmatpush1.xpose.msra.mxu0 0.0
    %1130 = vmatprep.subr.mxu0 0.0
    %1131 = vmatpush1.xpose.msra.mxu0 0.0
    %1132 = vmatprep.subr.mxu0 0.0
    %1133 = vmatpush1.xpose.msra.mxu0 0.0
    %1134 = vmatprep.subr.mxu0 0.0
    %1135 = vmatpush1.xpose.msra.mxu0 0.0
    %1136 = vmatprep.subr.mxu0 0.0
    %1137 = vmatpush1.xpose.msra.mxu0 0.0
    %1138 = vmatprep.subr.mxu0 0.0
    %1139 = vmatpush1.xpose.msra.mxu0 0.0
    %1140 = vmatprep.subr.mxu0 0.0
    %1141 = vmatpush1.xpose.msra.mxu0 0.0
    %1142 = vmatprep.subr.mxu0 0.0
    %1143 = vmatpush1.xpose.msra.mxu0 0.0
    %1144 = vmatprep.subr.mxu0 0.0
    %1145 = vmatpush1.xpose.msra.mxu0 0.0
    %1146 = vmatprep.subr.mxu0 0.0
    %1147 = vmatpush1.xpose.msra.mxu0 0.0
    %1148 = vmatprep.subr.mxu0 0.0
    %1149 = vmatpush1.xpose.msra.mxu0 %v1116
    %1150 = vmatprep.subr.mxu0 0.0
    %1151 = vmatpush2.xpose.msra.mxu0 0.0
    %1152 = vmatprep.subr.mxu0 0.0
    %1153 = vmatpush2.xpose.msra.mxu0 0.0
    %1154 = vmatprep.subr.mxu0 0.0
    %1155 = vmatpush2.xpose.msra.mxu0 0.0
    %1156 = vmatprep.subr.mxu0 0.0
    %1157 = vmatpush2.xpose.msra.mxu0 0.0
    %1158 = vmatprep.subr.mxu0 0.0
    %1159 = vmatpush2.xpose.msra.mxu0 0.0
    %1160 = vmatprep.subr.mxu0 0.0
    %1161 = vmatpush2.xpose.msra.mxu0 0.0
    %1162 = vmatprep.subr.mxu0 0.0
    %1163 = vmatpush2.xpose.msra.mxu0 0.0
    %1164 = vmatprep.subr.mxu0 0.0
    %1165 = vmatpush2.xpose.msra.mxu0 0.0
    %1166 = vmatprep.subr.mxu0 0.0
    %1167 = vmatpush2.xpose.msra.mxu0 0.0
    %1168 = vmatprep.subr.mxu0 0.0
    %1169 = vmatpush2.xpose.msra.mxu0 0.0
    %1170 = vmatprep.subr.mxu0 0.0
    %1171 = vmatpush2.xpose.msra.mxu0 0.0
    %1172 = vmatprep.subr.mxu0 0.0
    %1173 = vmatpush2.xpose.msra.mxu0 0.0
    %1174 = vmatprep.subr.mxu0 0.0
    %1175 = vmatpush2.xpose.msra.mxu0 0.0
    %1176 = vmatprep.subr.mxu0 0.0
    %1177 = vmatpush2.xpose.msra.mxu0 0.0
    %1178 = vmatprep.subr.mxu0 0.0
    %1179 = vmatpush2.xpose.msra.mxu0 0.0
    %1180 = vmatprep.subr.mxu0 0.0
    %1181 = vmatpush2.xpose.msra.mxu0 0.0
    %1182 = vmatprep.mubr.f32.mxu0 0.0
    %1183 = vmatmul.mubr.f32.gmra.mxu0 %v1113
    %v1184 = vpop.f32.mrf.mxu0
    %v1185 = vadd.f32 0.0, %v1184
    %v1186 = vpop.f32.mrf.mxu0
    %1187 = vdwg.mxu0
    %v1189 = vsel %vm62, %v373, 0
    %v1192 = vsel %vm62, %v665, 0
    %1194 = vmatprep.subr.mxu0 0.0
    %1195 = vmatpush1.xpose.msra.mxu0 0.0
    %1196 = vmatprep.subr.mxu0 0.0
    %1197 = vmatpush1.xpose.msra.mxu0 0.0
    %1198 = vmatprep.subr.mxu0 0.0
    %1199 = vmatpush1.xpose.msra.mxu0 0.0
    %1200 = vmatprep.subr.mxu0 0.0
    %1201 = vmatpush1.xpose.msra.mxu0 0.0
    %1202 = vmatprep.subr.mxu0 0.0
    %1203 = vmatpush1.xpose.msra.mxu0 0.0
    %1204 = vmatprep.subr.mxu0 0.0
    %1205 = vmatpush1.xpose.msra.mxu0 0.0
    %1206 = vmatprep.subr.mxu0 0.0
    %1207 = vmatpush1.xpose.msra.mxu0 0.0
    %1208 = vmatprep.subr.mxu0 0.0
    %1209 = vmatpush1.xpose.msra.mxu0 0.0
    %1210 = vmatprep.subr.mxu0 0.0
    %1211 = vmatpush1.xpose.msra.mxu0 0.0
    %1212 = vmatprep.subr.mxu0 0.0
    %1213 = vmatpush1.xpose.msra.mxu0 0.0
    %1214 = vmatprep.subr.mxu0 0.0
    %1215 = vmatpush1.xpose.msra.mxu0 0.0
    %1216 = vmatprep.subr.mxu0 0.0
    %1217 = vmatpush1.xpose.msra.mxu0 0.0
    %1218 = vmatprep.subr.mxu0 0.0
    %1219 = vmatpush1.xpose.msra.mxu0 0.0
    %1220 = vmatprep.subr.mxu0 0.0
    %1221 = vmatpush1.xpose.msra.mxu0 0.0
    %1222 = vmatprep.subr.mxu0 0.0
    %1223 = vmatpush1.xpose.msra.mxu0 0.0
    %1224 = vmatprep.subr.mxu0 0.0
    %1225 = vmatpush1.xpose.msra.mxu0 %v1192
    %1226 = vmatprep.subr.mxu0 0.0
    %1227 = vmatpush2.xpose.msra.mxu0 0.0
    %1228 = vmatprep.subr.mxu0 0.0
    %1229 = vmatpush2.xpose.msra.mxu0 0.0
    %1230 = vmatprep.subr.mxu0 0.0
    %1231 = vmatpush2.xpose.msra.mxu0 0.0
    %1232 = vmatprep.subr.mxu0 0.0
    %1233 = vmatpush2.xpose.msra.mxu0 0.0
    %1234 = vmatprep.subr.mxu0 0.0
    %1235 = vmatpush2.xpose.msra.mxu0 0.0
    %1236 = vmatprep.subr.mxu0 0.0
    %1237 = vmatpush2.xpose.msra.mxu0 0.0
    %1238 = vmatprep.subr.mxu0 0.0
    %1239 = vmatpush2.xpose.msra.mxu0 0.0
    %1240 = vmatprep.subr.mxu0 0.0
    %1241 = vmatpush2.xpose.msra.mxu0 0.0
    %1242 = vmatprep.subr.mxu0 0.0
    %1243 = vmatpush2.xpose.msra.mxu0 0.0
    %1244 = vmatprep.subr.mxu0 0.0
    %1245 = vmatpush2.xpose.msra.mxu0 0.0
    %1246 = vmatprep.subr.mxu0 0.0
    %1247 = vmatpush2.xpose.msra.mxu0 0.0
    %1248 = vmatprep.subr.mxu0 0.0
    %1249 = vmatpush2.xpose.msra.mxu0 0.0
    %1250 = vmatprep.subr.mxu0 0.0
    %1251 = vmatpush2.xpose.msra.mxu0 0.0
    %1252 = vmatprep.subr.mxu0 0.0
    %1253 = vmatpush2.xpose.msra.mxu0 0.0
    %1254 = vmatprep.subr.mxu0 0.0
    %1255 = vmatpush2.xpose.msra.mxu0 0.0
    %1256 = vmatprep.subr.mxu0 0.0
    %1257 = vmatpush2.xpose.msra.mxu0 0.0
    %1258 = vmatprep.mubr.f32.mxu0 0.0
    %1259 = vmatmul.mubr.f32.gmra.mxu0 %v1189
    %v1260 = vpop.f32.mrf.mxu0
    %v1261 = vadd.f32 0.0, %v1260
    %v1262 = vpop.f32.mrf.mxu0
    %1263 = vdwg.mxu0
    %v1265 = vsel %vm62, %v441, 0
    %v1268 = vsel %vm62, %v733, 0
    %1270 = vmatprep.subr.mxu0 0.0
    %1271 = vmatpush1.xpose.msra.mxu0 0.0
    %1272 = vmatprep.subr.mxu0 0.0
    %1273 = vmatpush1.xpose.msra.mxu0 0.0
    %1274 = vmatprep.subr.mxu0 0.0
    %1275 = vmatpush1.xpose.msra.mxu0 0.0
    %1276 = vmatprep.subr.mxu0 0.0
    %1277 = vmatpush1.xpose.msra.mxu0 0.0
    %1278 = vmatprep.subr.mxu0 0.0
    %1279 = vmatpush1.xpose.msra.mxu0 0.0
    %1280 = vmatprep.subr.mxu0 0.0
    %1281 = vmatpush1.xpose.msra.mxu0 0.0
    %1282 = vmatprep.subr.mxu0 0.0
    %1283 = vmatpush1.xpose.msra.mxu0 0.0
    %1284 = vmatprep.subr.mxu0 0.0
    %1285 = vmatpush1.xpose.msra.mxu0 0.0
    %1286 = vmatprep.subr.mxu0 0.0
    %1287 = vmatpush1.xpose.msra.mxu0 0.0
    %1288 = vmatprep.subr.mxu0 0.0
    %1289 = vmatpush1.xpose.msra.mxu0 0.0
    %1290 = vmatprep.subr.mxu0 0.0
    %1291 = vmatpush1.xpose.msra.mxu0 0.0
    %1292 = vmatprep.subr.mxu0 0.0
    %1293 = vmatpush1.xpose.msra.mxu0 0.0
    %1294 = vmatprep.subr.mxu0 0.0
    %1295 = vmatpush1.xpose.msra.mxu0 0.0
    %1296 = vmatprep.subr.mxu0 0.0
    %1297 = vmatpush1.xpose.msra.mxu0 0.0
    %1298 = vmatprep.subr.mxu0 0.0
    %1299 = vmatpush1.xpose.msra.mxu0 0.0
    %1300 = vmatprep.subr.mxu0 0.0
    %1301 = vmatpush1.xpose.msra.mxu0 %v1268
    %1302 = vmatprep.subr.mxu0 0.0
    %1303 = vmatpush2.xpose.msra.mxu0 0.0
    %1304 = vmatprep.subr.mxu0 0.0
    %1305 = vmatpush2.xpose.msra.mxu0 0.0
    %1306 = vmatprep.subr.mxu0 0.0
    %1307 = vmatpush2.xpose.msra.mxu0 0.0
    %1308 = vmatprep.subr.mxu0 0.0
    %1309 = vmatpush2.xpose.msra.mxu0 0.0
    %1310 = vmatprep.subr.mxu0 0.0
    %1311 = vmatpush2.xpose.msra.mxu0 0.0
    %1312 = vmatprep.subr.mxu0 0.0
    %1313 = vmatpush2.xpose.msra.mxu0 0.0
    %1314 = vmatprep.subr.mxu0 0.0
    %1315 = vmatpush2.xpose.msra.mxu0 0.0
    %1316 = vmatprep.subr.mxu0 0.0
    %1317 = vmatpush2.xpose.msra.mxu0 0.0
    %1318 = vmatprep.subr.mxu0 0.0
    %1319 = vmatpush2.xpose.msra.mxu0 0.0
    %1320 = vmatprep.subr.mxu0 0.0
    %1321 = vmatpush2.xpose.msra.mxu0 0.0
    %1322 = vmatprep.subr.mxu0 0.0
    %1323 = vmatpush2.xpose.msra.mxu0 0.0
    %1324 = vmatprep.subr.mxu0 0.0
    %1325 = vmatpush2.xpose.msra.mxu0 0.0
    %1326 = vmatprep.subr.mxu0 0.0
    %1327 = vmatpush2.xpose.msra.mxu0 0.0
    %1328 = vmatprep.subr.mxu0 0.0
    %1329 = vmatpush2.xpose.msra.mxu0 0.0
    %1330 = vmatprep.subr.mxu0 0.0
    %1331 = vmatpush2.xpose.msra.mxu0 0.0
    %1332 = vmatprep.subr.mxu0 0.0
    %1333 = vmatpush2.xpose.msra.mxu0 0.0
    %1334 = vmatprep.mubr.f32.mxu0 0.0
    %1335 = vmatmul.mubr.f32.gmra.mxu0 %v1265
    %v1336 = vpop.f32.mrf.mxu0
    %v1337 = vadd.f32 0.0, %v1336
    %v1338 = vpop.f32.mrf.mxu0
    %1339 = vdwg.mxu0
    %v1341 = vsel %vm62, %v374, 0
    %v1344 = vsel %vm62, %v666, 0
    %1346 = vmatprep.subr.mxu0 0.0
    %1347 = vmatpush1.xpose.msra.mxu0 0.0
    %1348 = vmatprep.subr.mxu0 0.0
    %1349 = vmatpush1.xpose.msra.mxu0 0.0
    %1350 = vmatprep.subr.mxu0 0.0
    %1351 = vmatpush1.xpose.msra.mxu0 0.0
    %1352 = vmatprep.subr.mxu0 0.0
    %1353 = vmatpush1.xpose.msra.mxu0 0.0
    %1354 = vmatprep.subr.mxu0 0.0
    %1355 = vmatpush1.xpose.msra.mxu0 0.0
    %1356 = vmatprep.subr.mxu0 0.0
    %1357 = vmatpush1.xpose.msra.mxu0 0.0
    %1358 = vmatprep.subr.mxu0 0.0
    %1359 = vmatpush1.xpose.msra.mxu0 0.0
    %1360 = vmatprep.subr.mxu0 0.0
    %1361 = vmatpush1.xpose.msra.mxu0 0.0
    %1362 = vmatprep.subr.mxu0 0.0
    %1363 = vmatpush1.xpose.msra.mxu0 0.0
    %1364 = vmatprep.subr.mxu0 0.0
    %1365 = vmatpush1.xpose.msra.mxu0 0.0
    %1366 = vmatprep.subr.mxu0 0.0
    %1367 = vmatpush1.xpose.msra.mxu0 0.0
    %1368 = vmatprep.subr.mxu0 0.0
    %1369 = vmatpush1.xpose.msra.mxu0 0.0
    %1370 = vmatprep.subr.mxu0 0.0
    %1371 = vmatpush1.xpose.msra.mxu0 0.0
    %1372 = vmatprep.subr.mxu0 0.0
    %1373 = vmatpush1.xpose.msra.mxu0 0.0
    %1374 = vmatprep.subr.mxu0 0.0
    %1375 = vmatpush1.xpose.msra.mxu0 0.0
    %1376 = vmatprep.subr.mxu0 0.0
    %1377 = vmatpush1.xpose.msra.mxu0 %v1344
    %1378 = vmatprep.subr.mxu0 0.0
    %1379 = vmatpush2.xpose.msra.mxu0 0.0
    %1380 = vmatprep.subr.mxu0 0.0
    %1381 = vmatpush2.xpose.msra.mxu0 0.0
    %1382 = vmatprep.subr.mxu0 0.0
    %1383 = vmatpush2.xpose.msra.mxu0 0.0
    %1384 = vmatprep.subr.mxu0 0.0
    %1385 = vmatpush2.xpose.msra.mxu0 0.0
    %1386 = vmatprep.subr.mxu0 0.0
    %1387 = vmatpush2.xpose.msra.mxu0 0.0
    %1388 = vmatprep.subr.mxu0 0.0
    %1389 = vmatpush2.xpose.msra.mxu0 0.0
    %1390 = vmatprep.subr.mxu0 0.0
    %1391 = vmatpush2.xpose.msra.mxu0 0.0
    %1392 = vmatprep.subr.mxu0 0.0
    %1393 = vmatpush2.xpose.msra.mxu0 0.0
    %1394 = vmatprep.subr.mxu0 0.0
    %1395 = vmatpush2.xpose.msra.mxu0 0.0
    %1396 = vmatprep.subr.mxu0 0.0
    %1397 = vmatpush2.xpose.msra.mxu0 0.0
    %1398 = vmatprep.subr.mxu0 0.0
    %1399 = vmatpush2.xpose.msra.mxu0 0.0
    %1400 = vmatprep.subr.mxu0 0.0
    %1401 = vmatpush2.xpose.msra.mxu0 0.0
    %1402 = vmatprep.subr.mxu0 0.0
    %1403 = vmatpush2.xpose.msra.mxu0 0.0
    %1404 = vmatprep.subr.mxu0 0.0
    %1405 = vmatpush2.xpose.msra.mxu0 0.0
    %1406 = vmatprep.subr.mxu0 0.0
    %1407 = vmatpush2.xpose.msra.mxu0 0.0
    %1408 = vmatprep.subr.mxu0 0.0
    %1409 = vmatpush2.xpose.msra.mxu0 0.0
    %1410 = vmatprep.mubr.f32.mxu0 0.0
    %1411 = vmatmul.mubr.f32.gmra.mxu0 %v1341
    %v1412 = vpop.f32.mrf.mxu0
    %v1413 = vadd.f32 0.0, %v1412
    %v1414 = vpop.f32.mrf.mxu0
    %1415 = vdwg.mxu0
    %v1417 = vsel %vm62, %v442, 0
    %v1420 = vsel %vm62, %v734, 0
    %1422 = vmatprep.subr.mxu0 0.0
    %1423 = vmatpush1.xpose.msra.mxu0 0.0
    %1424 = vmatprep.subr.mxu0 0.0
    %1425 = vmatpush1.xpose.msra.mxu0 0.0
    %1426 = vmatprep.subr.mxu0 0.0
    %1427 = vmatpush1.xpose.msra.mxu0 0.0
    %1428 = vmatprep.subr.mxu0 0.0
    %1429 = vmatpush1.xpose.msra.mxu0 0.0
    %1430 = vmatprep.subr.mxu0 0.0
    %1431 = vmatpush1.xpose.msra.mxu0 0.0
    %1432 = vmatprep.subr.mxu0 0.0
    %1433 = vmatpush1.xpose.msra.mxu0 0.0
    %1434 = vmatprep.subr.mxu0 0.0
    %1435 = vmatpush1.xpose.msra.mxu0 0.0
    %1436 = vmatprep.subr.mxu0 0.0
    %1437 = vmatpush1.xpose.msra.mxu0 0.0
    %1438 = vmatprep.subr.mxu0 0.0
    %1439 = vmatpush1.xpose.msra.mxu0 0.0
    %1440 = vmatprep.subr.mxu0 0.0
    %1441 = vmatpush1.xpose.msra.mxu0 0.0
    %1442 = vmatprep.subr.mxu0 0.0
    %1443 = vmatpush1.xpose.msra.mxu0 0.0
    %1444 = vmatprep.subr.mxu0 0.0
    %1445 = vmatpush1.xpose.msra.mxu0 0.0
    %1446 = vmatprep.subr.mxu0 0.0
    %1447 = vmatpush1.xpose.msra.mxu0 0.0
    %1448 = vmatprep.subr.mxu0 0.0
    %1449 = vmatpush1.xpose.msra.mxu0 0.0
    %1450 = vmatprep.subr.mxu0 0.0
    %1451 = vmatpush1.xpose.msra.mxu0 0.0
    %1452 = vmatprep.subr.mxu0 0.0
    %1453 = vmatpush1.xpose.msra.mxu0 %v1420
    %1454 = vmatprep.subr.mxu0 0.0
    %1455 = vmatpush2.xpose.msra.mxu0 0.0
    %1456 = vmatprep.subr.mxu0 0.0
    %1457 = vmatpush2.xpose.msra.mxu0 0.0
    %1458 = vmatprep.subr.mxu0 0.0
    %1459 = vmatpush2.xpose.msra.mxu0 0.0
    %1460 = vmatprep.subr.mxu0 0.0
    %1461 = vmatpush2.xpose.msra.mxu0 0.0
    %1462 = vmatprep.subr.mxu0 0.0
    %1463 = vmatpush2.xpose.msra.mxu0 0.0
    %1464 = vmatprep.subr.mxu0 0.0
    %1465 = vmatpush2.xpose.msra.mxu0 0.0
    %1466 = vmatprep.subr.mxu0 0.0
    %1467 = vmatpush2.xpose.msra.mxu0 0.0
    %1468 = vmatprep.subr.mxu0 0.0
    %1469 = vmatpush2.xpose.msra.mxu0 0.0
    %1470 = vmatprep.subr.mxu0 0.0
    %1471 = vmatpush2.xpose.msra.mxu0 0.0
    %1472 = vmatprep.subr.mxu0 0.0
    %1473 = vmatpush2.xpose.msra.mxu0 0.0
    %1474 = vmatprep.subr.mxu0 0.0
    %1475 = vmatpush2.xpose.msra.mxu0 0.0
    %1476 = vmatprep.subr.mxu0 0.0
    %1477 = vmatpush2.xpose.msra.mxu0 0.0
    %1478 = vmatprep.subr.mxu0 0.0
    %1479 = vmatpush2.xpose.msra.mxu0 0.0
    %1480 = vmatprep.subr.mxu0 0.0
    %1481 = vmatpush2.xpose.msra.mxu0 0.0
    %1482 = vmatprep.subr.mxu0 0.0
    %1483 = vmatpush2.xpose.msra.mxu0 0.0
    %1484 = vmatprep.subr.mxu0 0.0
    %1485 = vmatpush2.xpose.msra.mxu0 0.0
    %1486 = vmatprep.mubr.f32.mxu0 0.0
    %1487 = vmatmul.mubr.f32.gmra.mxu0 %v1417
    %v1488 = vpop.f32.mrf.mxu0
    %v1489 = vadd.f32 0.0, %v1488
    %v1490 = vpop.f32.mrf.mxu0
    %1491 = vdwg.mxu0
    %v1493 = vsel %vm62, %v375, 0
    %v1496 = vsel %vm62, %v667, 0
    %1498 = vmatprep.subr.mxu0 0.0
    %1499 = vmatpush1.xpose.msra.mxu0 0.0
    %1500 = vmatprep.subr.mxu0 0.0
    %1501 = vmatpush1.xpose.msra.mxu0 0.0
    %1502 = vmatprep.subr.mxu0 0.0
    %1503 = vmatpush1.xpose.msra.mxu0 0.0
    %1504 = vmatprep.subr.mxu0 0.0
    %1505 = vmatpush1.xpose.msra.mxu0 0.0
    %1506 = vmatprep.subr.mxu0 0.0
    %1507 = vmatpush1.xpose.msra.mxu0 0.0
    %1508 = vmatprep.subr.mxu0 0.0
    %1509 = vmatpush1.xpose.msra.mxu0 0.0
    %1510 = vmatprep.subr.mxu0 0.0
    %1511 = vmatpush1.xpose.msra.mxu0 0.0
    %1512 = vmatprep.subr.mxu0 0.0
    %1513 = vmatpush1.xpose.msra.mxu0 0.0
    %1514 = vmatprep.subr.mxu0 0.0
    %1515 = vmatpush1.xpose.msra.mxu0 0.0
    %1516 = vmatprep.subr.mxu0 0.0
    %1517 = vmatpush1.xpose.msra.mxu0 0.0
    %1518 = vmatprep.subr.mxu0 0.0
    %1519 = vmatpush1.xpose.msra.mxu0 0.0
    %1520 = vmatprep.subr.mxu0 0.0
    %1521 = vmatpush1.xpose.msra.mxu0 0.0
    %1522 = vmatprep.subr.mxu0 0.0
    %1523 = vmatpush1.xpose.msra.mxu0 0.0
    %1524 = vmatprep.subr.mxu0 0.0
    %1525 = vmatpush1.xpose.msra.mxu0 0.0
    %1526 = vmatprep.subr.mxu0 0.0
    %1527 = vmatpush1.xpose.msra.mxu0 0.0
    %1528 = vmatprep.subr.mxu0 0.0
    %1529 = vmatpush1.xpose.msra.mxu0 %v1496
    %1530 = vmatprep.subr.mxu0 0.0
    %1531 = vmatpush2.xpose.msra.mxu0 0.0
    %1532 = vmatprep.subr.mxu0 0.0
    %1533 = vmatpush2.xpose.msra.mxu0 0.0
    %1534 = vmatprep.subr.mxu0 0.0
    %1535 = vmatpush2.xpose.msra.mxu0 0.0
    %1536 = vmatprep.subr.mxu0 0.0
    %1537 = vmatpush2.xpose.msra.mxu0 0.0
    %1538 = vmatprep.subr.mxu0 0.0
    %1539 = vmatpush2.xpose.msra.mxu0 0.0
    %1540 = vmatprep.subr.mxu0 0.0
    %1541 = vmatpush2.xpose.msra.mxu0 0.0
    %1542 = vmatprep.subr.mxu0 0.0
    %1543 = vmatpush2.xpose.msra.mxu0 0.0
    %1544 = vmatprep.subr.mxu0 0.0
    %1545 = vmatpush2.xpose.msra.mxu0 0.0
    %1546 = vmatprep.subr.mxu0 0.0
    %1547 = vmatpush2.xpose.msra.mxu0 0.0
    %1548 = vmatprep.subr.mxu0 0.0
    %1549 = vmatpush2.xpose.msra.mxu0 0.0
    %1550 = vmatprep.subr.mxu0 0.0
    %1551 = vmatpush2.xpose.msra.mxu0 0.0
    %1552 = vmatprep.subr.mxu0 0.0
    %1553 = vmatpush2.xpose.msra.mxu0 0.0
    %1554 = vmatprep.subr.mxu0 0.0
    %1555 = vmatpush2.xpose.msra.mxu0 0.0
    %1556 = vmatprep.subr.mxu0 0.0
    %1557 = vmatpush2.xpose.msra.mxu0 0.0
    %1558 = vmatprep.subr.mxu0 0.0
    %1559 = vmatpush2.xpose.msra.mxu0 0.0
    %1560 = vmatprep.subr.mxu0 0.0
    %1561 = vmatpush2.xpose.msra.mxu0 0.0
    %1562 = vmatprep.mubr.f32.mxu0 0.0
    %1563 = vmatmul.mubr.f32.gmra.mxu0 %v1493
    %v1564 = vpop.f32.mrf.mxu0
    %v1565 = vadd.f32 0.0, %v1564
    %v1566 = vpop.f32.mrf.mxu0
    %1567 = vdwg.mxu0
    %v1569 = vsel %vm62, %v443, 0
    %v1572 = vsel %vm62, %v735, 0
    %1574 = vmatprep.subr.mxu0 0.0
    %1575 = vmatpush1.xpose.msra.mxu0 0.0
    %1576 = vmatprep.subr.mxu0 0.0
    %1577 = vmatpush1.xpose.msra.mxu0 0.0
    %1578 = vmatprep.subr.mxu0 0.0
    %1579 = vmatpush1.xpose.msra.mxu0 0.0
    %1580 = vmatprep.subr.mxu0 0.0
    %1581 = vmatpush1.xpose.msra.mxu0 0.0
    %1582 = vmatprep.subr.mxu0 0.0
    %1583 = vmatpush1.xpose.msra.mxu0 0.0
    %1584 = vmatprep.subr.mxu0 0.0
    %1585 = vmatpush1.xpose.msra.mxu0 0.0
    %1586 = vmatprep.subr.mxu0 0.0
    %1587 = vmatpush1.xpose.msra.mxu0 0.0
    %1588 = vmatprep.subr.mxu0 0.0
    %1589 = vmatpush1.xpose.msra.mxu0 0.0
    %1590 = vmatprep.subr.mxu0 0.0
    %1591 = vmatpush1.xpose.msra.mxu0 0.0
    %1592 = vmatprep.subr.mxu0 0.0
    %1593 = vmatpush1.xpose.msra.mxu0 0.0
    %1594 = vmatprep.subr.mxu0 0.0
    %1595 = vmatpush1.xpose.msra.mxu0 0.0
    %1596 = vmatprep.subr.mxu0 0.0
    %1597 = vmatpush1.xpose.msra.mxu0 0.0
    %1598 = vmatprep.subr.mxu0 0.0
    %1599 = vmatpush1.xpose.msra.mxu0 0.0
    %1600 = vmatprep.subr.mxu0 0.0
    %1601 = vmatpush1.xpose.msra.mxu0 0.0
    %1602 = vmatprep.subr.mxu0 0.0
    %1603 = vmatpush1.xpose.msra.mxu0 0.0
    %1604 = vmatprep.subr.mxu0 0.0
    %1605 = vmatpush1.xpose.msra.mxu0 %v1572
    %1606 = vmatprep.subr.mxu0 0.0
    %1607 = vmatpush2.xpose.msra.mxu0 0.0
    %1608 = vmatprep.subr.mxu0 0.0
    %1609 = vmatpush2.xpose.msra.mxu0 0.0
    %1610 = vmatprep.subr.mxu0 0.0
    %1611 = vmatpush2.xpose.msra.mxu0 0.0
    %1612 = vmatprep.subr.mxu0 0.0
    %1613 = vmatpush2.xpose.msra.mxu0 0.0
    %1614 = vmatprep.subr.mxu0 0.0
    %1615 = vmatpush2.xpose.msra.mxu0 0.0
    %1616 = vmatprep.subr.mxu0 0.0
    %1617 = vmatpush2.xpose.msra.mxu0 0.0
    %1618 = vmatprep.subr.mxu0 0.0
    %1619 = vmatpush2.xpose.msra.mxu0 0.0
    %1620 = vmatprep.subr.mxu0 0.0
    %1621 = vmatpush2.xpose.msra.mxu0 0.0
    %1622 = vmatprep.subr.mxu0 0.0
    %1623 = vmatpush2.xpose.msra.mxu0 0.0
    %1624 = vmatprep.subr.mxu0 0.0
    %1625 = vmatpush2.xpose.msra.mxu0 0.0
    %1626 = vmatprep.subr.mxu0 0.0
    %1627 = vmatpush2.xpose.msra.mxu0 0.0
    %1628 = vmatprep.subr.mxu0 0.0
    %1629 = vmatpush2.xpose.msra.mxu0 0.0
    %1630 = vmatprep.subr.mxu0 0.0
    %1631 = vmatpush2.xpose.msra.mxu0 0.0
    %1632 = vmatprep.subr.mxu0 0.0
    %1633 = vmatpush2.xpose.msra.mxu0 0.0
    %1634 = vmatprep.subr.mxu0 0.0
    %1635 = vmatpush2.xpose.msra.mxu0 0.0
    %1636 = vmatprep.subr.mxu0 0.0
    %1637 = vmatpush2.xpose.msra.mxu0 0.0
    %1638 = vmatprep.mubr.f32.mxu0 0.0
    %1639 = vmatmul.mubr.f32.gmra.mxu0 %v1569
    %v1640 = vpop.f32.mrf.mxu0
    %v1641 = vadd.f32 0.0, %v1640
    %v1642 = vpop.f32.mrf.mxu0
    %1643 = vdwg.mxu0
    %vm1644 = vcmask 64512
    %v1645 = vsel %vm1644, %v1109, -inf
    %1646 = vmax.xlane.f32.xlu0 %v1645
    %v1647 = vpop.xlane.xlu0 %1646
    %v1648 = vsel %vm1644, %v1185, -inf
    %1649 = vmax.xlane.f32.xlu0 %v1648
    %v1650 = vpop.xlane.xlu0 %1649
    %v1651 = vsel %vm1644, %v1261, -inf
    %1652 = vmax.xlane.f32.xlu0 %v1651
    %v1653 = vpop.xlane.xlu0 %1652
    %v1654 = vsel %vm1644, %v1337, -inf
    %1655 = vmax.xlane.f32.xlu0 %v1654
    %v1656 = vpop.xlane.xlu0 %1655
    %v1657 = vsel %vm1644, %v1413, -inf
    %1658 = vmax.xlane.f32.xlu0 %v1657
    %v1659 = vpop.xlane.xlu0 %1658
    %v1660 = vsel %vm1644, %v1489, -inf
    %1661 = vmax.xlane.f32.xlu0 %v1660
    %v1662 = vpop.xlane.xlu0 %1661
    %v1663 = vsel %vm1644, %v1565, -inf
    %1664 = vmax.xlane.f32.xlu0 %v1663
    %v1665 = vpop.xlane.xlu0 %1664
    %v1666 = vsel %vm1644, %v1641, -inf
    %1667 = vmax.xlane.f32.xlu0 %v1666
    %v1668 = vpop.xlane.xlu0 %1667
    %v1669 = vsub.f32 %v1109, %v1647
    %v1670 = vsub.f32 %v1185, %v1650
    %v1671 = vsub.f32 %v1261, %v1653
    %v1672 = vsub.f32 %v1337, %v1656
    %v1673 = vsub.f32 %v1413, %v1659
    %v1674 = vsub.f32 %v1489, %v1662
    %v1675 = vsub.f32 %v1565, %v1665
    %v1676 = vsub.f32 %v1641, %v1668
    %v1677 = vmul.f32 %v1669, 1.442695
    %v1678 = vpow.pop %v1677
    %v1679 = vmul.f32 %v1670, 1.442695
    %v1680 = vpow.pop %v1679
    %v1681 = vmul.f32 %v1671, 1.442695
    %v1682 = vpow.pop %v1681
    %v1683 = vmul.f32 %v1672, 1.442695
    %v1684 = vpow.pop %v1683
    %v1685 = vmul.f32 %v1673, 1.442695
    %v1686 = vpow.pop %v1685
    %v1687 = vmul.f32 %v1674, 1.442695
    %v1688 = vpow.pop %v1687
    %v1689 = vmul.f32 %v1675, 1.442695
    %v1690 = vpow.pop %v1689
    %v1691 = vmul.f32 %v1676, 1.442695
    %v1692 = vpow.pop %v1691
    %v1693 = vsel %vm1644, %v1678, 0.0
    %1694 = vadd.xlane.f32.xlu0 %v1693
    %v1695 = vpop.xlane.xlu0 %1694
    %v1696 = vsel %vm1644, %v1680, 0.0
    %1697 = vadd.xlane.f32.xlu0 %v1696
    %v1698 = vpop.xlane.xlu0 %1697
    %v1699 = vsel %vm1644, %v1682, 0.0
    %1700 = vadd.xlane.f32.xlu0 %v1699
    %v1701 = vpop.xlane.xlu0 %1700
    %v1702 = vsel %vm1644, %v1684, 0.0
    %1703 = vadd.xlane.f32.xlu0 %v1702
    %v1704 = vpop.xlane.xlu0 %1703
    %v1705 = vsel %vm1644, %v1686, 0.0
    %1706 = vadd.xlane.f32.xlu0 %v1705
    %v1707 = vpop.xlane.xlu0 %1706
    %v1708 = vsel %vm1644, %v1688, 0.0
    %1709 = vadd.xlane.f32.xlu0 %v1708
    %v1710 = vpop.xlane.xlu0 %1709
    %v1711 = vsel %vm1644, %v1690, 0.0
    %1712 = vadd.xlane.f32.xlu0 %v1711
    %v1713 = vpop.xlane.xlu0 %1712
    %v1714 = vsel %vm1644, %v1692, 0.0
    %1715 = vadd.xlane.f32.xlu0 %v1714
    %v1716 = vpop.xlane.xlu0 %1715
    %v1717 = vrcp.pop %v1695
    %v1718 = vrcp.pop %v1698
    %v1719 = vrcp.pop %v1701
    %v1720 = vrcp.pop %v1704
    %v1721 = vrcp.pop %v1707
    %v1722 = vrcp.pop %v1710
    %v1723 = vrcp.pop %v1713
    %v1724 = vrcp.pop %v1716
    %v1725 = vmul.f32 %v1678, %v1717
    %v1726 = vmul.f32 %v1680, %v1718
    %v1727 = vmul.f32 %v1682, %v1719
    %v1728 = vmul.f32 %v1684, %v1720
    %v1729 = vmul.f32 %v1686, %v1721
    %v1730 = vmul.f32 %v1688, %v1722
    %v1731 = vmul.f32 %v1690, %v1723
    %v1732 = vmul.f32 %v1692, %v1724
    %v1733 = vpack.c.bf16 %v1725, %v1725
    %v1734 = vpack.c.bf16 %v1726, %v1726
    %v1735 = vpack.c.bf16 %v1727, %v1727
    %v1736 = vpack.c.bf16 %v1728, %v1728
    %v1737 = vpack.c.bf16 %v1729, %v1729
    %v1738 = vpack.c.bf16 %v1730, %v1730
    %v1739 = vpack.c.bf16 %v1731, %v1731
    %v1740 = vpack.c.bf16 %v1732, %v1732
    %v1742 = vsel %vm1644, %v1733, 0
    %vm1744 = vcmask 1043456
    %v1746 = vsel %vm1744, %v1028, 0
    %1748 = vmatprep.subr.bf16.mxu0 0
    %1749 = vmatpush1.bf16.msra.mxu0 0
    %1750 = vmatprep.subr.bf16.mxu0 0
    %1751 = vmatpush1.bf16.msra.mxu0 0
    %1752 = vmatprep.subr.bf16.mxu0 0
    %1753 = vmatpush1.bf16.msra.mxu0 0
    %1754 = vmatprep.subr.bf16.mxu0 0
    %1755 = vmatpush1.bf16.msra.mxu0 0
    %1756 = vmatprep.subr.bf16.mxu0 0
    %1757 = vmatpush1.bf16.msra.mxu0 0
    %1758 = vmatprep.subr.bf16.mxu0 0
    %1759 = vmatpush1.bf16.msra.mxu0 0
    %1760 = vmatprep.subr.bf16.mxu0 0
    %1761 = vmatpush1.bf16.msra.mxu0 0
    %1762 = vmatprep.subr.bf16.mxu0 0
    %1763 = vmatpush1.bf16.msra.mxu0 %v1746
    %1764 = vmatprep.subr.bf16.mxu0 0
    %1765 = vmatpush2.bf16.msra.mxu0 0
    %1766 = vmatprep.subr.bf16.mxu0 0
    %1767 = vmatpush2.bf16.msra.mxu0 0
    %1768 = vmatprep.subr.bf16.mxu0 0
    %1769 = vmatpush2.bf16.msra.mxu0 0
    %1770 = vmatprep.subr.bf16.mxu0 0
    %1771 = vmatpush2.bf16.msra.mxu0 0
    %1772 = vmatprep.subr.bf16.mxu0 0
    %1773 = vmatpush2.bf16.msra.mxu0 0
    %1774 = vmatprep.subr.bf16.mxu0 0
    %1775 = vmatpush2.bf16.msra.mxu0 0
    %1776 = vmatprep.subr.bf16.mxu0 0
    %1777 = vmatpush2.bf16.msra.mxu0 0
    %1778 = vmatprep.subr.bf16.mxu0 0
    %1779 = vmatpush2.bf16.msra.mxu0 0
    %1780 = vmatprep.mubr.bf16.mxu0 0
    %1781 = vmatmul.mubr.bf16.gmra.mxu0 %v1742
    %v1782 = vpop.f32.mrf.mxu0
    %v1783 = vadd.f32 0.0, %v1782
    %v1784 = vpop.f32.mrf.mxu0
    %v1785 = vpop.f32.mrf.mxu0
    %v1786 = vpop.f32.mrf.mxu0
    %1787 = vdwg.mxu0
    %v1789 = vsel %vm1644, %v1734, 0
    %v1792 = vsel %vm1744, %v1029, 0
    %1794 = vmatprep.subr.bf16.mxu0 0
    %1795 = vmatpush1.bf16.msra.mxu0 0
    %1796 = vmatprep.subr.bf16.mxu0 0
    %1797 = vmatpush1.bf16.msra.mxu0 0
    %1798 = vmatprep.subr.bf16.mxu0 0
    %1799 = vmatpush1.bf16.msra.mxu0 0
    %1800 = vmatprep.subr.bf16.mxu0 0
    %1801 = vmatpush1.bf16.msra.mxu0 0
    %1802 = vmatprep.subr.bf16.mxu0 0
    %1803 = vmatpush1.bf16.msra.mxu0 0
    %1804 = vmatprep.subr.bf16.mxu0 0
    %1805 = vmatpush1.bf16.msra.mxu0 0
    %1806 = vmatprep.subr.bf16.mxu0 0
    %1807 = vmatpush1.bf16.msra.mxu0 0
    %1808 = vmatprep.subr.bf16.mxu0 0
    %1809 = vmatpush1.bf16.msra.mxu0 %v1792
    %1810 = vmatprep.subr.bf16.mxu0 0
    %1811 = vmatpush2.bf16.msra.mxu0 0
    %1812 = vmatprep.subr.bf16.mxu0 0
    %1813 = vmatpush2.bf16.msra.mxu0 0
    %1814 = vmatprep.subr.bf16.mxu0 0
    %1815 = vmatpush2.bf16.msra.mxu0 0
    %1816 = vmatprep.subr.bf16.mxu0 0
    %1817 = vmatpush2.bf16.msra.mxu0 0
    %1818 = vmatprep.subr.bf16.mxu0 0
    %1819 = vmatpush2.bf16.msra.mxu0 0
    %1820 = vmatprep.subr.bf16.mxu0 0
    %1821 = vmatpush2.bf16.msra.mxu0 0
    %1822 = vmatprep.subr.bf16.mxu0 0
    %1823 = vmatpush2.bf16.msra.mxu0 0
    %1824 = vmatprep.subr.bf16.mxu0 0
    %1825 = vmatpush2.bf16.msra.mxu0 0
    %1826 = vmatprep.mubr.bf16.mxu0 0
    %1827 = vmatmul.mubr.bf16.gmra.mxu0 %v1789
    %v1828 = vpop.f32.mrf.mxu0
    %v1829 = vadd.f32 0.0, %v1828
    %v1830 = vpop.f32.mrf.mxu0
    %v1831 = vpop.f32.mrf.mxu0
    %v1832 = vpop.f32.mrf.mxu0
    %1833 = vdwg.mxu0
    %v1835 = vsel %vm1644, %v1735, 0
    %v1838 = vsel %vm1744, %v1030, 0
    %1840 = vmatprep.subr.bf16.mxu0 0
    %1841 = vmatpush1.bf16.msra.mxu0 0
    %1842 = vmatprep.subr.bf16.mxu0 0
    %1843 = vmatpush1.bf16.msra.mxu0 0
    %1844 = vmatprep.subr.bf16.mxu0 0
    %1845 = vmatpush1.bf16.msra.mxu0 0
    %1846 = vmatprep.subr.bf16.mxu0 0
    %1847 = vmatpush1.bf16.msra.mxu0 0
    %1848 = vmatprep.subr.bf16.mxu0 0
    %1849 = vmatpush1.bf16.msra.mxu0 0
    %1850 = vmatprep.subr.bf16.mxu0 0
    %1851 = vmatpush1.bf16.msra.mxu0 0
    %1852 = vmatprep.subr.bf16.mxu0 0
    %1853 = vmatpush1.bf16.msra.mxu0 0
    %1854 = vmatprep.subr.bf16.mxu0 0
    %1855 = vmatpush1.bf16.msra.mxu0 %v1838
    %1856 = vmatprep.subr.bf16.mxu0 0
    %1857 = vmatpush2.bf16.msra.mxu0 0
    %1858 = vmatprep.subr.bf16.mxu0 0
    %1859 = vmatpush2.bf16.msra.mxu0 0
    %1860 = vmatprep.subr.bf16.mxu0 0
    %1861 = vmatpush2.bf16.msra.mxu0 0
    %1862 = vmatprep.subr.bf16.mxu0 0
    %1863 = vmatpush2.bf16.msra.mxu0 0
    %1864 = vmatprep.subr.bf16.mxu0 0
    %1865 = vmatpush2.bf16.msra.mxu0 0
    %1866 = vmatprep.subr.bf16.mxu0 0
    %1867 = vmatpush2.bf16.msra.mxu0 0
    %1868 = vmatprep.subr.bf16.mxu0 0
    %1869 = vmatpush2.bf16.msra.mxu0 0
    %1870 = vmatprep.subr.bf16.mxu0 0
    %1871 = vmatpush2.bf16.msra.mxu0 0
    %1872 = vmatprep.mubr.bf16.mxu0 0
    %1873 = vmatmul.mubr.bf16.gmra.mxu0 %v1835
    %v1874 = vpop.f32.mrf.mxu0
    %v1875 = vadd.f32 0.0, %v1874
    %v1876 = vpop.f32.mrf.mxu0
    %v1877 = vpop.f32.mrf.mxu0
    %v1878 = vpop.f32.mrf.mxu0
    %1879 = vdwg.mxu0
    %v1881 = vsel %vm1644, %v1736, 0
    %v1884 = vsel %vm1744, %v1031, 0
    %1886 = vmatprep.subr.bf16.mxu0 0
    %1887 = vmatpush1.bf16.msra.mxu0 0
    %1888 = vmatprep.subr.bf16.mxu0 0
    %1889 = vmatpush1.bf16.msra.mxu0 0
    %1890 = vmatprep.subr.bf16.mxu0 0
    %1891 = vmatpush1.bf16.msra.mxu0 0
    %1892 = vmatprep.subr.bf16.mxu0 0
    %1893 = vmatpush1.bf16.msra.mxu0 0
    %1894 = vmatprep.subr.bf16.mxu0 0
    %1895 = vmatpush1.bf16.msra.mxu0 0
    %1896 = vmatprep.subr.bf16.mxu0 0
    %1897 = vmatpush1.bf16.msra.mxu0 0
    %1898 = vmatprep.subr.bf16.mxu0 0
    %1899 = vmatpush1.bf16.msra.mxu0 0
    %1900 = vmatprep.subr.bf16.mxu0 0
    %1901 = vmatpush1.bf16.msra.mxu0 %v1884
    %1902 = vmatprep.subr.bf16.mxu0 0
    %1903 = vmatpush2.bf16.msra.mxu0 0
    %1904 = vmatprep.subr.bf16.mxu0 0
    %1905 = vmatpush2.bf16.msra.mxu0 0
    %1906 = vmatprep.subr.bf16.mxu0 0
    %1907 = vmatpush2.bf16.msra.mxu0 0
    %1908 = vmatprep.subr.bf16.mxu0 0
    %1909 = vmatpush2.bf16.msra.mxu0 0
    %1910 = vmatprep.subr.bf16.mxu0 0
    %1911 = vmatpush2.bf16.msra.mxu0 0
    %1912 = vmatprep.subr.bf16.mxu0 0
    %1913 = vmatpush2.bf16.msra.mxu0 0
    %1914 = vmatprep.subr.bf16.mxu0 0
    %1915 = vmatpush2.bf16.msra.mxu0 0
    %1916 = vmatprep.subr.bf16.mxu0 0
    %1917 = vmatpush2.bf16.msra.mxu0 0
    %1918 = vmatprep.mubr.bf16.mxu0 0
    %1919 = vmatmul.mubr.bf16.gmra.mxu0 %v1881
    %v1920 = vpop.f32.mrf.mxu0
    %v1921 = vadd.f32 0.0, %v1920
    %v1922 = vpop.f32.mrf.mxu0
    %v1923 = vpop.f32.mrf.mxu0
    %v1924 = vpop.f32.mrf.mxu0
    %1925 = vdwg.mxu0
    %v1927 = vsel %vm1644, %v1737, 0
    %v1930 = vsel %vm1744, %v1032, 0
    %1932 = vmatprep.subr.bf16.mxu0 0
    %1933 = vmatpush1.bf16.msra.mxu0 0
    %1934 = vmatprep.subr.bf16.mxu0 0
    %1935 = vmatpush1.bf16.msra.mxu0 0
    %1936 = vmatprep.subr.bf16.mxu0 0
    %1937 = vmatpush1.bf16.msra.mxu0 0
    %1938 = vmatprep.subr.bf16.mxu0 0
    %1939 = vmatpush1.bf16.msra.mxu0 0
    %1940 = vmatprep.subr.bf16.mxu0 0
    %1941 = vmatpush1.bf16.msra.mxu0 0
    %1942 = vmatprep.subr.bf16.mxu0 0
    %1943 = vmatpush1.bf16.msra.mxu0 0
    %1944 = vmatprep.subr.bf16.mxu0 0
    %1945 = vmatpush1.bf16.msra.mxu0 0
    %1946 = vmatprep.subr.bf16.mxu0 0
    %1947 = vmatpush1.bf16.msra.mxu0 %v1930
    %1948 = vmatprep.subr.bf16.mxu0 0
    %1949 = vmatpush2.bf16.msra.mxu0 0
    %1950 = vmatprep.subr.bf16.mxu0 0
    %1951 = vmatpush2.bf16.msra.mxu0 0
    %1952 = vmatprep.subr.bf16.mxu0 0
    %1953 = vmatpush2.bf16.msra.mxu0 0
    %1954 = vmatprep.subr.bf16.mxu0 0
    %1955 = vmatpush2.bf16.msra.mxu0 0
    %1956 = vmatprep.subr.bf16.mxu0 0
    %1957 = vmatpush2.bf16.msra.mxu0 0
    %1958 = vmatprep.subr.bf16.mxu0 0
    %1959 = vmatpush2.bf16.msra.mxu0 0
    %1960 = vmatprep.subr.bf16.mxu0 0
    %1961 = vmatpush2.bf16.msra.mxu0 0
    %1962 = vmatprep.subr.bf16.mxu0 0
    %1963 = vmatpush2.bf16.msra.mxu0 0
    %1964 = vmatprep.mubr.bf16.mxu0 0
    %1965 = vmatmul.mubr.bf16.gmra.mxu0 %v1927
    %v1966 = vpop.f32.mrf.mxu0
    %v1967 = vadd.f32 0.0, %v1966
    %v1968 = vpop.f32.mrf.mxu0
    %v1969 = vpop.f32.mrf.mxu0
    %v1970 = vpop.f32.mrf.mxu0
    %1971 = vdwg.mxu0
    %v1973 = vsel %vm1644, %v1738, 0
    %v1976 = vsel %vm1744, %v1033, 0
    %1978 = vmatprep.subr.bf16.mxu0 0
    %1979 = vmatpush1.bf16.msra.mxu0 0
    %1980 = vmatprep.subr.bf16.mxu0 0
    %1981 = vmatpush1.bf16.msra.mxu0 0
    %1982 = vmatprep.subr.bf16.mxu0 0
    %1983 = vmatpush1.bf16.msra.mxu0 0
    %1984 = vmatprep.subr.bf16.mxu0 0
    %1985 = vmatpush1.bf16.msra.mxu0 0
    %1986 = vmatprep.subr.bf16.mxu0 0
    %1987 = vmatpush1.bf16.msra.mxu0 0
    %1988 = vmatprep.subr.bf16.mxu0 0
    %1989 = vmatpush1.bf16.msra.mxu0 0
    %1990 = vmatprep.subr.bf16.mxu0 0
    %1991 = vmatpush1.bf16.msra.mxu0 0
    %1992 = vmatprep.subr.bf16.mxu0 0
    %1993 = vmatpush1.bf16.msra.mxu0 %v1976
    %1994 = vmatprep.subr.bf16.mxu0 0
    %1995 = vmatpush2.bf16.msra.mxu0 0
    %1996 = vmatprep.subr.bf16.mxu0 0
    %1997 = vmatpush2.bf16.msra.mxu0 0
    %1998 = vmatprep.subr.bf16.mxu0 0
    %1999 = vmatpush2.bf16.msra.mxu0 0
    %2000 = vmatprep.subr.bf16.mxu0 0
    %2001 = vmatpush2.bf16.msra.mxu0 0
    %2002 = vmatprep.subr.bf16.mxu0 0
    %2003 = vmatpush2.bf16.msra.mxu0 0
    %2004 = vmatprep.subr.bf16.mxu0 0
    %2005 = vmatpush2.bf16.msra.mxu0 0
    %2006 = vmatprep.subr.bf16.mxu0 0
    %2007 = vmatpush2.bf16.msra.mxu0 0
    %2008 = vmatprep.subr.bf16.mxu0 0
    %2009 = vmatpush2.bf16.msra.mxu0 0
    %2010 = vmatprep.mubr.bf16.mxu0 0
    %2011 = vmatmul.mubr.bf16.gmra.mxu0 %v1973
    %v2012 = vpop.f32.mrf.mxu0
    %v2013 = vadd.f32 0.0, %v2012
    %v2014 = vpop.f32.mrf.mxu0
    %v2015 = vpop.f32.mrf.mxu0
    %v2016 = vpop.f32.mrf.mxu0
    %2017 = vdwg.mxu0
    %v2019 = vsel %vm1644, %v1739, 0
    %v2022 = vsel %vm1744, %v1034, 0
    %2024 = vmatprep.subr.bf16.mxu0 0
    %2025 = vmatpush1.bf16.msra.mxu0 0
    %2026 = vmatprep.subr.bf16.mxu0 0
    %2027 = vmatpush1.bf16.msra.mxu0 0
    %2028 = vmatprep.subr.bf16.mxu0 0
    %2029 = vmatpush1.bf16.msra.mxu0 0
    %2030 = vmatprep.subr.bf16.mxu0 0
    %2031 = vmatpush1.bf16.msra.mxu0 0
    %2032 = vmatprep.subr.bf16.mxu0 0
    %2033 = vmatpush1.bf16.msra.mxu0 0
    %2034 = vmatprep.subr.bf16.mxu0 0
    %2035 = vmatpush1.bf16.msra.mxu0 0
    %2036 = vmatprep.subr.bf16.mxu0 0
    %2037 = vmatpush1.bf16.msra.mxu0 0
    %2038 = vmatprep.subr.bf16.mxu0 0
    %2039 = vmatpush1.bf16.msra.mxu0 %v2022
    %2040 = vmatprep.subr.bf16.mxu0 0
    %2041 = vmatpush2.bf16.msra.mxu0 0
    %2042 = vmatprep.subr.bf16.mxu0 0
    %2043 = vmatpush2.bf16.msra.mxu0 0
    %2044 = vmatprep.subr.bf16.mxu0 0
    %2045 = vmatpush2.bf16.msra.mxu0 0
    %2046 = vmatprep.subr.bf16.mxu0 0
    %2047 = vmatpush2.bf16.msra.mxu0 0
    %2048 = vmatprep.subr.bf16.mxu0 0
    %2049 = vmatpush2.bf16.msra.mxu0 0
    %2050 = vmatprep.subr.bf16.mxu0 0
    %2051 = vmatpush2.bf16.msra.mxu0 0
    %2052 = vmatprep.subr.bf16.mxu0 0
    %2053 = vmatpush2.bf16.msra.mxu0 0
    %2054 = vmatprep.subr.bf16.mxu0 0
    %2055 = vmatpush2.bf16.msra.mxu0 0
    %2056 = vmatprep.mubr.bf16.mxu0 0
    %2057 = vmatmul.mubr.bf16.gmra.mxu0 %v2019
    %v2058 = vpop.f32.mrf.mxu0
    %v2059 = vadd.f32 0.0, %v2058
    %v2060 = vpop.f32.mrf.mxu0
    %v2061 = vpop.f32.mrf.mxu0
    %v2062 = vpop.f32.mrf.mxu0
    %2063 = vdwg.mxu0
    %v2065 = vsel %vm1644, %v1740, 0
    %v2068 = vsel %vm1744, %v1035, 0
    %2070 = vmatprep.subr.bf16.mxu0 0
    %2071 = vmatpush1.bf16.msra.mxu0 0
    %2072 = vmatprep.subr.bf16.mxu0 0
    %2073 = vmatpush1.bf16.msra.mxu0 0
    %2074 = vmatprep.subr.bf16.mxu0 0
    %2075 = vmatpush1.bf16.msra.mxu0 0
    %2076 = vmatprep.subr.bf16.mxu0 0
    %2077 = vmatpush1.bf16.msra.mxu0 0
    %2078 = vmatprep.subr.bf16.mxu0 0
    %2079 = vmatpush1.bf16.msra.mxu0 0
    %2080 = vmatprep.subr.bf16.mxu0 0
    %2081 = vmatpush1.bf16.msra.mxu0 0
    %2082 = vmatprep.subr.bf16.mxu0 0
    %2083 = vmatpush1.bf16.msra.mxu0 0
    %2084 = vmatprep.subr.bf16.mxu0 0
    %2085 = vmatpush1.bf16.msra.mxu0 %v2068
    %2086 = vmatprep.subr.bf16.mxu0 0
    %2087 = vmatpush2.bf16.msra.mxu0 0
    %2088 = vmatprep.subr.bf16.mxu0 0
    %2089 = vmatpush2.bf16.msra.mxu0 0
    %2090 = vmatprep.subr.bf16.mxu0 0
    %2091 = vmatpush2.bf16.msra.mxu0 0
    %2092 = vmatprep.subr.bf16.mxu0 0
    %2093 = vmatpush2.bf16.msra.mxu0 0
    %2094 = vmatprep.subr.bf16.mxu0 0
    %2095 = vmatpush2.bf16.msra.mxu0 0
    %2096 = vmatprep.subr.bf16.mxu0 0
    %2097 = vmatpush2.bf16.msra.mxu0 0
    %2098 = vmatprep.subr.bf16.mxu0 0
    %2099 = vmatpush2.bf16.msra.mxu0 0
    %2100 = vmatprep.subr.bf16.mxu0 0
    %2101 = vmatpush2.bf16.msra.mxu0 0
    %2102 = vmatprep.mubr.bf16.mxu0 0
    %2103 = vmatmul.mubr.bf16.gmra.mxu0 %v2065
    %v2104 = vpop.f32.mrf.mxu0
    %v2105 = vadd.f32 0.0, %v2104
    %v2106 = vpop.f32.mrf.mxu0
    %v2107 = vpop.f32.mrf.mxu0
    %v2108 = vpop.f32.mrf.mxu0
    %2109 = vdwg.mxu0
    %v2110 = vcombine.low %v1783, %v1967
    %v2111 = vcombine.high %v1783, %v1967
    %v2113 = vunpack.c.l.s4 1983009808
    %v2114 = vunpack.c.0.s8 %v2113
    %v2115 = vlaneseq
    %v2116 = vshrl.u32 %v2115, 7
    %v2117 = vsub.s32 %v2114, %v2116
    %v2118 = vrot.slane %v2110, %v2117
    %v2120 = vunpack.c.l.s4 1983009808
    %v2121 = vunpack.c.0.s8 %v2120
    %v2122 = vlaneseq
    %v2123 = vshrl.u32 %v2122, 7
    %v2124 = vsub.s32 %v2121, %v2123
    %v2125 = vrot.slane %v2111, %v2124
    %v2126 = vcombine.low %v1875, %v2059
    %v2127 = vcombine.high %v1875, %v2059
    %v2129 = vunpack.c.l.s4 1983009808
    %v2130 = vunpack.c.0.s8 %v2129
    %v2131 = vlaneseq
    %v2132 = vshrl.u32 %v2131, 7
    %v2133 = vsub.s32 %v2130, %v2132
    %v2134 = vrot.slane %v2126, %v2133
    %v2136 = vunpack.c.l.s4 1983009808
    %v2137 = vunpack.c.0.s8 %v2136
    %v2138 = vlaneseq
    %v2139 = vshrl.u32 %v2138, 7
    %v2140 = vsub.s32 %v2137, %v2139
    %v2141 = vrot.slane %v2127, %v2140
    %v2142 = vcombine.low %v2118, %v2134
    %v2143 = vcombine.high %v2118, %v2134
    %v2145 = vunpack.c.l.s4 1934713408
    %v2146 = vunpack.c.0.s8 %v2145
    %v2147 = vlaneseq
    %v2148 = vshrl.u32 %v2147, 7
    %v2149 = vsub.s32 %v2146, %v2148
    %v2150 = vrot.slane %v2142, %v2149
    %v2152 = vunpack.c.l.s4 1934713408
    %v2153 = vunpack.c.0.s8 %v2152
    %v2154 = vlaneseq
    %v2155 = vshrl.u32 %v2154, 7
    %v2156 = vsub.s32 %v2153, %v2155
    %v2157 = vrot.slane %v2143, %v2156
    %v2158 = vcombine.low %v2125, %v2141
    %v2159 = vcombine.high %v2125, %v2141
    %v2161 = vunpack.c.l.s4 1934713408
    %v2162 = vunpack.c.0.s8 %v2161
    %v2163 = vlaneseq
    %v2164 = vshrl.u32 %v2163, 7
    %v2165 = vsub.s32 %v2162, %v2164
    %v2166 = vrot.slane %v2158, %v2165
    %v2168 = vunpack.c.l.s4 1934713408
    %v2169 = vunpack.c.0.s8 %v2168
    %v2170 = vlaneseq
    %v2171 = vshrl.u32 %v2170, 7
    %v2172 = vsub.s32 %v2169, %v2171
    %v2173 = vrot.slane %v2159, %v2172
    %v2174 = vcombine.high %v2150, 0.0
    %v2175 = vcombine.high %v2157, 0.0
    %v2176 = vcombine.high %v2166, 0.0
    %v2177 = vcombine.high %v2173, 0.0
    %v2178 = vcombine.low %v1829, %v2013
    %v2179 = vcombine.high %v1829, %v2013
    %v2181 = vunpack.c.l.s4 1983009808
    %v2182 = vunpack.c.0.s8 %v2181
    %v2183 = vlaneseq
    %v2184 = vshrl.u32 %v2183, 7
    %v2185 = vsub.s32 %v2182, %v2184
    %v2186 = vrot.slane %v2178, %v2185
    %v2188 = vunpack.c.l.s4 1983009808
    %v2189 = vunpack.c.0.s8 %v2188
    %v2190 = vlaneseq
    %v2191 = vshrl.u32 %v2190, 7
    %v2192 = vsub.s32 %v2189, %v2191
    %v2193 = vrot.slane %v2179, %v2192
    %v2194 = vcombine.low %v1921, %v2105
    %v2195 = vcombine.high %v1921, %v2105
    %v2197 = vunpack.c.l.s4 1983009808
    %v2198 = vunpack.c.0.s8 %v2197
    %v2199 = vlaneseq
    %v2200 = vshrl.u32 %v2199, 7
    %v2201 = vsub.s32 %v2198, %v2200
    %v2202 = vrot.slane %v2194, %v2201
    %v2204 = vunpack.c.l.s4 1983009808
    %v2205 = vunpack.c.0.s8 %v2204
    %v2206 = vlaneseq
    %v2207 = vshrl.u32 %v2206, 7
    %v2208 = vsub.s32 %v2205, %v2207
    %v2209 = vrot.slane %v2195, %v2208
    %v2210 = vcombine.low %v2186, %v2202
    %v2211 = vcombine.high %v2186, %v2202
    %v2213 = vunpack.c.l.s4 1934713408
    %v2214 = vunpack.c.0.s8 %v2213
    %v2215 = vlaneseq
    %v2216 = vshrl.u32 %v2215, 7
    %v2217 = vsub.s32 %v2214, %v2216
    %v2218 = vrot.slane %v2210, %v2217
    %v2220 = vunpack.c.l.s4 1934713408
    %v2221 = vunpack.c.0.s8 %v2220
    %v2222 = vlaneseq
    %v2223 = vshrl.u32 %v2222, 7
    %v2224 = vsub.s32 %v2221, %v2223
    %v2225 = vrot.slane %v2211, %v2224
    %v2226 = vcombine.low %v2193, %v2209
    %v2227 = vcombine.high %v2193, %v2209
    %v2229 = vunpack.c.l.s4 1934713408
    %v2230 = vunpack.c.0.s8 %v2229
    %v2231 = vlaneseq
    %v2232 = vshrl.u32 %v2231, 7
    %v2233 = vsub.s32 %v2230, %v2232
    %v2234 = vrot.slane %v2226, %v2233
    %v2236 = vunpack.c.l.s4 1934713408
    %v2237 = vunpack.c.0.s8 %v2236
    %v2238 = vlaneseq
    %v2239 = vshrl.u32 %v2238, 7
    %v2240 = vsub.s32 %v2237, %v2239
    %v2241 = vrot.slane %v2227, %v2240
    %v2242 = vcombine.high %v2218, 0.0
    %v2243 = vcombine.high %v2225, 0.0
    %v2244 = vcombine.high %v2234, 0.0
    %v2245 = vcombine.high %v2241, 0.0
    %v2246 = vcombine.low %v2150, %v2157
    %v2248 = vunpack.c.l.s4 1983009808
    %v2249 = vunpack.c.0.s8 %v2248
    %v2250 = vlaneseq
    %v2251 = vshrl.u32 %v2250, 7
    %v2252 = vsub.s32 %v2249, %v2251
    %v2253 = vrot.slane %v2246, %v2252
    %v2254 = vcombine.low %v2174, %v2175
    %v2256 = vunpack.c.l.s4 1983009808
    %v2257 = vunpack.c.0.s8 %v2256
    %v2258 = vlaneseq
    %v2259 = vshrl.u32 %v2258, 7
    %v2260 = vsub.s32 %v2257, %v2259
    %v2261 = vrot.slane %v2254, %v2260
    %v2262 = vcombine.low %v2166, %v2173
    %v2264 = vunpack.c.l.s4 1983009808
    %v2265 = vunpack.c.0.s8 %v2264
    %v2266 = vlaneseq
    %v2267 = vshrl.u32 %v2266, 7
    %v2268 = vsub.s32 %v2265, %v2267
    %v2269 = vrot.slane %v2262, %v2268
    %v2270 = vcombine.low %v2176, %v2177
    %v2272 = vunpack.c.l.s4 1983009808
    %v2273 = vunpack.c.0.s8 %v2272
    %v2274 = vlaneseq
    %v2275 = vshrl.u32 %v2274, 7
    %v2276 = vsub.s32 %v2273, %v2275
    %v2277 = vrot.slane %v2270, %v2276
    %v2278 = vcombine.low %v2253, %v2261
    %v2279 = vcombine.high %v2253, %v2261
    %v2281 = vunpack.c.l.s4 1934713408
    %v2282 = vunpack.c.0.s8 %v2281
    %v2283 = vlaneseq
    %v2284 = vshrl.u32 %v2283, 7
    %v2285 = vsub.s32 %v2282, %v2284
    %v2286 = vrot.slane %v2278, %v2285
    %v2288 = vunpack.c.l.s4 1934713408
    %v2289 = vunpack.c.0.s8 %v2288
    %v2290 = vlaneseq
    %v2291 = vshrl.u32 %v2290, 7
    %v2292 = vsub.s32 %v2289, %v2291
    %v2293 = vrot.slane %v2279, %v2292
    %v2294 = vcombine.low %v2269, %v2277
    %v2295 = vcombine.high %v2269, %v2277
    %v2297 = vunpack.c.l.s4 1934713408
    %v2298 = vunpack.c.0.s8 %v2297
    %v2299 = vlaneseq
    %v2300 = vshrl.u32 %v2299, 7
    %v2301 = vsub.s32 %v2298, %v2300
    %v2302 = vrot.slane %v2294, %v2301
    %v2304 = vunpack.c.l.s4 1934713408
    %v2305 = vunpack.c.0.s8 %v2304
    %v2306 = vlaneseq
    %v2307 = vshrl.u32 %v2306, 7
    %v2308 = vsub.s32 %v2305, %v2307
    %v2309 = vrot.slane %v2295, %v2308
    %v2310 = vcombine.low %v2286, %v2302
    %v2311 = vcombine.high %v2286, %v2302
    %v2312 = vcombine.low %v2293, %v2309
    %v2313 = vcombine.high %v2293, %v2309
    %v2314 = vcombine.low %v2218, %v2225
    %v2316 = vunpack.c.l.s4 1983009808
    %v2317 = vunpack.c.0.s8 %v2316
    %v2318 = vlaneseq
    %v2319 = vshrl.u32 %v2318, 7
    %v2320 = vsub.s32 %v2317, %v2319
    %v2321 = vrot.slane %v2314, %v2320
    %v2322 = vcombine.low %v2242, %v2243
    %v2324 = vunpack.c.l.s4 1983009808
    %v2325 = vunpack.c.0.s8 %v2324
    %v2326 = vlaneseq
    %v2327 = vshrl.u32 %v2326, 7
    %v2328 = vsub.s32 %v2325, %v2327
    %v2329 = vrot.slane %v2322, %v2328
    %v2330 = vcombine.low %v2234, %v2241
    %v2332 = vunpack.c.l.s4 1983009808
    %v2333 = vunpack.c.0.s8 %v2332
    %v2334 = vlaneseq
    %v2335 = vshrl.u32 %v2334, 7
    %v2336 = vsub.s32 %v2333, %v2335
    %v2337 = vrot.slane %v2330, %v2336
    %v2338 = vcombine.low %v2244, %v2245
    %v2340 = vunpack.c.l.s4 1983009808
    %v2341 = vunpack.c.0.s8 %v2340
    %v2342 = vlaneseq
    %v2343 = vshrl.u32 %v2342, 7
    %v2344 = vsub.s32 %v2341, %v2343
    %v2345 = vrot.slane %v2338, %v2344
    %v2346 = vcombine.low %v2321, %v2329
    %v2347 = vcombine.high %v2321, %v2329
    %v2349 = vunpack.c.l.s4 1934713408
    %v2350 = vunpack.c.0.s8 %v2349
    %v2351 = vlaneseq
    %v2352 = vshrl.u32 %v2351, 7
    %v2353 = vsub.s32 %v2350, %v2352
    %v2354 = vrot.slane %v2346, %v2353
    %v2356 = vunpack.c.l.s4 1934713408
    %v2357 = vunpack.c.0.s8 %v2356
    %v2358 = vlaneseq
    %v2359 = vshrl.u32 %v2358, 7
    %v2360 = vsub.s32 %v2357, %v2359
    %v2361 = vrot.slane %v2347, %v2360
    %v2362 = vcombine.low %v2337, %v2345
    %v2363 = vcombine.high %v2337, %v2345
    %v2365 = vunpack.c.l.s4 1934713408
    %v2366 = vunpack.c.0.s8 %v2365
    %v2367 = vlaneseq
    %v2368 = vshrl.u32 %v2367, 7
    %v2369 = vsub.s32 %v2366, %v2368
    %v2370 = vrot.slane %v2362, %v2369
    %v2372 = vunpack.c.l.s4 1934713408
    %v2373 = vunpack.c.0.s8 %v2372
    %v2374 = vlaneseq
    %v2375 = vshrl.u32 %v2374, 7
    %v2376 = vsub.s32 %v2373, %v2375
    %v2377 = vrot.slane %v2363, %v2376
    %v2378 = vcombine.low %v2354, %v2370
    %v2379 = vcombine.high %v2354, %v2370
    %v2380 = vcombine.low %v2361, %v2377
    %v2381 = vcombine.high %v2361, %v2377
    %2384 = vrot.lane.b32.xlu0 %v2311, 32
    %v2385 = vpop.permute.xlu0 %2384
    %2386 = vrot.lane.b32.xlu0 %v2379, 32
    %v2387 = vpop.permute.xlu0 %2386
    %2392 = vrot.lane.b32.xlu0 %v2312, 64
    %v2393 = vpop.permute.xlu0 %2392
    %2394 = vrot.lane.b32.xlu0 %v2380, 64
    %v2395 = vpop.permute.xlu0 %2394
    %2400 = vrot.lane.b32.xlu0 %v2313, 96
    %v2401 = vpop.permute.xlu0 %2400
    %2402 = vrot.lane.b32.xlu0 %v2381, 96
    %v2403 = vpop.permute.xlu0 %2402
    %v2406 = vsel %vm62, %v2310, %v2385
    %v2407 = vsel %vm62, %v2378, %v2387
    %vm2408 = vcmask 523264
    %v2409 = vsel %vm2408, %v2406, %v2393
    %v2410 = vsel %vm2408, %v2407, %v2395
    %vm2411 = vcmask 785408
    %v2412 = vsel %vm2411, %v2409, %v2401
    %v2413 = vsel %vm2411, %v2410, %v2403
    %2414 = vst [vmem:[#allocation7] sm:$0xff] %v2412
    %2415 = vst [vmem:[#allocation7 + $0x8] sm:$0xff] %v2413
    // Predicated region
    $region18: #{tpu_custom_call.1} parent=1 // pred_check
      _
    $region19: #{tpu_custom_call.1} parent=1 // pred_check_branch
      %2417 = sbr.rel (0) target = $region21
    $region20: #{tpu_custom_call.1} parent=1 // pred_region
      %s2419 = ssub.s32 256, 256
      %2420 = vsyncadd [#allocation4], %s2419
      %s2421 = sshll.u32 [#allocation7], 4
      %s2422 = int_to_ptr.vmem [resolvable:$true] %s2421
      %2427 = dma.vmem_to_hbm [thread:$0]  %s2422, 256, %s2, [#allocation4], 128, 128, 8
    $region21: #{tpu_custom_call.1} parent=1 // pred_fallthru
      _
    // Predicated region
    $region22: #{tpu_custom_call.1} parent=1 // pred_check
      _
    $region23: #{tpu_custom_call.1} parent=1 // pred_check_branch
      %2429 = sbr.rel (0) target = $region25
    $region24: #{tpu_custom_call.1} parent=1 // pred_region
      %2430 = dma.done [#allocation4], 256
    $region25: #{tpu_custom_call.1} parent=1 // pred_fallthru
      _
    %2431 = vsyncpa [#allocation3], 1
    %2432 = vsyncpa [#allocation6], 1
    %2433 = vsyncpa [#allocation4], 1

</llo_original>
